<compile_context>
chip_gen: v6e
topology: v6e:2x2x1
jax: 0.10.0
libtpu: 0.0.40
codegen_flags: <defaults>
</compile_context>

<pallas_src>
import functools
import inspect

import jax
import jax.numpy as jnp
import numpy as np
from jax import lax
from jax.experimental import pallas as pl
from jax.experimental.pallas import tpu as pltpu


def _ru(x, m):
    return (x + m - 1) // m * m


def _conv_up_kernel(x_ref, w_ref, shift_ref, o_ref, *, HBLK, W2, K, M, WIN):
    # x_ref:     (1, R, Cin)      bf16 flattened zero-padded image (pixel-major rows)
    # w_ref:     (K*K*Cin, Cout)  bf16 conv weights with BN scale folded in,
    #                             row index = (dy*K + dx)*Cin + cin
    # shift_ref: (1, Cout)        f32 folded conv-bias/BN shift
    # o_ref:     (1, M, 4*Cout)   bf16, rows = conv-output pixels of this H block
    #                             (incl. the 2 junk pad columns per image row),
    #                             lanes = (rh, rw, cout) of the 2x2 nearest upsample.
    base = pl.multiple_of(pl.program_id(1) * (HBLK * W2), HBLK * W2)

    # One dynamic window load that covers all K*K tap slices of this row block.
    win = x_ref[0, pl.ds(base, WIN), :]                              # (WIN, Cin)

    # In-kernel im2col: tap (dy, dx) is the same window shifted by dy*(W+2)+dx pixels.
    # Tap slabs are only Cin lanes wide, so the lane concat is a cheap pack; padding each
    # slab to 128 lanes would multiply the MXU contraction passes instead.
    taps = [win[dy * W2 + dx:dy * W2 + dx + M, :]
            for dy in range(K) for dx in range(K)]
    lhs = jnp.concatenate(taps, axis=-1)                             # (M, K*K*Cin) bf16

    # Single MXU matmul per grid step (M >= 256 rows), f32 accumulation.
    acc = jnp.dot(lhs, w_ref[...], preferred_element_type=jnp.float32)   # (M, Cout)

    # Folded inference BatchNorm (scale already inside w) + LeakyReLU(0.1), bf16 cast.
    y = acc + shift_ref[...]
    y = jnp.where(y > 0, y, 0.1 * y).astype(o_ref.dtype)             # (M, Cout)

    # Nearest 2x2 upsample as a 4-way lane duplication; one multi-row store
    # (lane-dense once 4*Cout >= 128, i.e. at real WARP_Model channel counts).
    o_ref[0, :, :] = jnp.concatenate([y, y, y, y], axis=-1)          # (M, 4*Cout)


def conv_up_forward(x_nchw, w_oihw, b, gamma, beta, run_mean, run_var, eps=1e-5):
    """Pallas implementation of Conv_up.forward. Input/output are NCHW like PyTorch."""
    N, Cin, H, W = x_nchw.shape
    Cout, _, K, _ = w_oihw.shape
    assert K % 2 == 1, "'same' padding here assumes an odd kernel size"
    pad = K // 2
    W2 = W + 2 * pad                      # padded width (pixels per padded image row)

    # ---- row-block choice: M = hblk*W2 >= 256 matmul rows, hblk a multiple of 16 -------
    min_rows = -(-256 // W2)
    target = max(min_rows, 16)
    hblk = None
    for d in range(target, min(H, 4 * target) + 1):
        if H % d == 0 and (d * W2) % 8 == 0:
            hblk = d
            break
    if hblk is None:
        hblk = min(H, _ru(target, 16))
    H_pad = _ru(H, hblk)
    if H_pad // hblk > 1 and (hblk * W2) % 8 != 0:
        hblk, H_pad = H, H                # single full-H block -> block == full array dims
    M = hblk * W2
    WIN = _ru(M + (K - 1) * W2 + (K - 1), 8)
    K2Cin = K * K * Cin

    # ---- glue: NHWC + zero padding + pixel-major flatten (plain JAX) --------------------
    # TODO(synk): at full WARP_Model resolutions, block the pixel axis with a manual halo
    # DMA (pl.ANY + make_async_copy) instead of keeping the whole per-image buffer
    # resident, and keep this packed layout between layers to avoid NCHW<->NHWC passes.
    xp = jnp.transpose(x_nchw, (0, 2, 3, 1))
    xp = jnp.pad(xp, ((0, 0), (pad, pad + (H_pad - H)), (pad, pad), (0, 0)))
    R_img = (H_pad + 2 * pad) * W2
    flat = xp.reshape(N, R_img, Cin)
    R = _ru((H_pad - hblk) * W2 + WIN, 16)
    flat = jnp.pad(flat, ((0, 0), (1, R - R_img - 1), (0, 0))).astype(jnp.bfloat16)

    # ---- fold conv bias + inference-mode BatchNorm; scale goes into the weights ---------
    # TODO(synk): training-mode batch-statistics BatchNorm is not reproduced here.
    scale = (gamma / jnp.sqrt(run_var + eps)).astype(jnp.float32)            # (Cout,)
    shift = (beta + (b - run_mean) * scale).astype(jnp.float32).reshape(1, Cout)
    wt = jnp.transpose(w_oihw, (2, 3, 1, 0)).astype(jnp.float32)             # (K,K,Cin,Cout)
    w_fold = (wt * scale[None, None, None, :]).reshape(K2Cin, Cout).astype(jnp.bfloat16)

    # ---- pallas call --------------------------------------------------------------------
    grid = (N, H_pad // hblk)

    # Single-buffer the grid-constant operands (weights, shift); the per-image input keeps
    # the default double buffer so image n+1's DMA overlaps the last block of image n.
    try:
        has_buffered = (hasattr(pl, "Buffered")
                        and "pipeline_mode" in inspect.signature(pl.BlockSpec).parameters)
    except (ValueError, TypeError):
        has_buffered = False

    def const_spec(shape):
        if has_buffered:
            return pl.BlockSpec(shape, lambda n, hb: (0, 0), pipeline_mode=pl.Buffered(1))
        return pl.BlockSpec(shape, lambda n, hb: (0, 0))

    # Explicit VMEM budget with headroom (v7x: 64 MiB physical, 32 MiB default scoped).
    lanes = lambda c: _ru(c, 128)
    vmem_est = (2 * R * lanes(Cin) * 2                     # input image buffers, bf16
                + _ru(K2Cin, 16) * lanes(Cout) * 2         # folded weights, bf16
                + 16 * lanes(Cout) * 4                     # shift, f32
                + 2 * _ru(M, 16) * lanes(4 * Cout) * 2)    # output blocks (2 bufs), bf16
    vmem_limit = int(min(64 << 20, max(16 << 20, 2 * vmem_est)))

    kernel = functools.partial(_conv_up_kernel, HBLK=hblk, W2=W2, K=K, M=M, WIN=WIN)
    out = pl.pallas_call(
        kernel,
        out_shape=jax.ShapeDtypeStruct((N, H_pad * W2, 4 * Cout), jnp.bfloat16),
        grid=grid,
        in_specs=[
            pl.BlockSpec((1, R, Cin), lambda n, hb: (n, 0, 0)),   # resident across hb
            const_spec((K2Cin, Cout)),
            const_spec((1, Cout)),
        ],
        out_specs=pl.BlockSpec((1, M, 4 * Cout), lambda n, hb: (n, hb, 0)),
        compiler_params=pltpu.CompilerParams(
            dimension_semantics=("parallel", "parallel"),
            vmem_limit_bytes=vmem_limit),
    )(flat, w_fold, shift)

    # Rows of `out` are conv-output pixels (incl. pad columns / padded rows); lanes are
    # (rh, rw, cout).  Drop the junk, interleave the 2x2 duplicates, and go back to NCHW
    # (the NCHW transpose was already needed for PyTorch parity, so this is one pass).
    out = out.reshape(N, H_pad, W2, 2, 2, Cout)[:, :H, pad:pad + W]
    out = jnp.transpose(out, (0, 5, 1, 3, 2, 4)).reshape(N, Cout, 2 * H, 2 * W)
    return out


def conv_up_reference(x_nchw, w_oihw, b, gamma, beta, run_mean, run_var, eps=1e-5):
    """Pure-JAX reference of the PyTorch Conv_up forward (eval-mode BatchNorm)."""
    z = lax.conv_general_dilated(
        x_nchw, w_oihw, window_strides=(1, 1), padding="SAME",
        dimension_numbers=("NCHW", "OIHW", "NCHW"),
        precision=lax.Precision.HIGHEST,
    ) + b[None, :, None, None]
    z = (z - run_mean[None, :, None, None]) / jnp.sqrt(run_var[None, :, None, None] + eps)
    z = z * gamma[None, :, None, None] + beta[None, :, None, None]
    z = jnp.where(z > 0, z, 0.1 * z)
    z = jnp.repeat(jnp.repeat(z, 2, axis=2), 2, axis=3)   # nearest x2
    return z


if __name__ == "__main__":
    N, Cin, Cout, H, W, K = 2, 4, 8, 16, 16, 3

    key = jax.random.PRNGKey(0)
    kx, kw, kb, kg, kbeta, km, kv = jax.random.split(key, 7)
    x = jax.random.normal(kx, (N, Cin, H, W), jnp.float32)
    w = 0.1 * jax.random.normal(kw, (Cout, Cin, K, K), jnp.float32)
    b = 0.1 * jax.random.normal(kb, (Cout,), jnp.float32)
    gamma = 1.0 + 0.1 * jax.random.normal(kg, (Cout,), jnp.float32)
    beta = 0.1 * jax.random.normal(kbeta, (Cout,), jnp.float32)
    run_mean = 0.1 * jax.random.normal(km, (Cout,), jnp.float32)
    run_var = jax.random.uniform(kv, (Cout,), jnp.float32, minval=0.5, maxval=1.5)

    out = conv_up_forward(x, w, b, gamma, beta, run_mean, run_var)
    out = jax.block_until_ready(out)

    ref = conv_up_reference(x, w, b, gamma, beta, run_mean, run_var)
    ref = jax.block_until_ready(ref)

    assert out.shape == (N, Cout, 2 * H, 2 * W), out.shape
    # bf16 matmul inputs + bf16 output -> looser tolerance vs. the f32 HIGHEST reference.
    np.testing.assert_allclose(np.asarray(out.astype(jnp.float32)), np.asarray(ref),
                               rtol=2e-2, atol=2e-2)
    print("KERNEL_OK")
</pallas_src>

<mosaic_0001>
module attributes {stable_mosaic.version = 11 : i64} {
  func.func @_conv_up_kernel(%arg0: i32, %arg1: i32, %arg2: memref<1x336x4xbf16, #tpu.memory_space<vmem>>, %arg3: memref<36x8xbf16, #tpu.memory_space<vmem>>, %arg4: memref<1x8xf32, #tpu.memory_space<vmem>>, %arg5: memref<1x288x32xbf16, #tpu.memory_space<vmem>>) attributes {dimension_semantics = [#tpu.dimension_semantics<parallel>, #tpu.dimension_semantics<parallel>], iteration_bounds = array<i64: 2, 1>, scalar_prefetch = 0 : i64, scratch_operands = 0 : i64, tpu.core_type = #tpu.core_type<tc>, window_params = [{transform_indices = @transform_0, window_bounds = array<i64: 1, 336, 4>}, {pipeline_mode = #tpu.pipeline_mode<synchronous>, transform_indices = @transform_1, window_bounds = array<i64: 36, 8>}, {pipeline_mode = #tpu.pipeline_mode<synchronous>, transform_indices = @transform_2, window_bounds = array<i64: 1, 8>}, {transform_indices = @transform_3, window_bounds = array<i64: 1, 288, 32>}]} {
    %c288_i32 = arith.constant 288 : i32
    %0 = arith.muli %arg1, %c288_i32 : i32
    %1 = tpu.assume_multiple %0, 288 : i32
    %c0 = arith.constant 0 : index
    %2 = arith.index_cast %1 : i32 to index
    %c0_0 = arith.constant 0 : index
    %3 = vector.load %arg2[%c0, %2, %c0_0] : memref<1x336x4xbf16, #tpu.memory_space<vmem>>, vector<1x328x4xbf16>
    %4 = vector.shape_cast %3 : vector<1x328x4xbf16> to vector<328x4xbf16>
    %5 = vector.extract_strided_slice %4 {offsets = [0, 0], sizes = [288, 4], strides = [1, 1]} : vector<328x4xbf16> to vector<288x4xbf16>
    %6 = vector.extract_strided_slice %4 {offsets = [1, 0], sizes = [288, 4], strides = [1, 1]} : vector<328x4xbf16> to vector<288x4xbf16>
    %7 = vector.extract_strided_slice %4 {offsets = [2, 0], sizes = [288, 4], strides = [1, 1]} : vector<328x4xbf16> to vector<288x4xbf16>
    %8 = vector.extract_strided_slice %4 {offsets = [18, 0], sizes = [288, 4], strides = [1, 1]} : vector<328x4xbf16> to vector<288x4xbf16>
    %9 = vector.extract_strided_slice %4 {offsets = [19, 0], sizes = [288, 4], strides = [1, 1]} : vector<328x4xbf16> to vector<288x4xbf16>
    %10 = vector.extract_strided_slice %4 {offsets = [20, 0], sizes = [288, 4], strides = [1, 1]} : vector<328x4xbf16> to vector<288x4xbf16>
    %11 = vector.extract_strided_slice %4 {offsets = [36, 0], sizes = [288, 4], strides = [1, 1]} : vector<328x4xbf16> to vector<288x4xbf16>
    %12 = vector.extract_strided_slice %4 {offsets = [37, 0], sizes = [288, 4], strides = [1, 1]} : vector<328x4xbf16> to vector<288x4xbf16>
    %13 = vector.extract_strided_slice %4 {offsets = [38, 0], sizes = [288, 4], strides = [1, 1]} : vector<328x4xbf16> to vector<288x4xbf16>
    %14 = tpu.concatenate %5, %6, %7, %8, %9, %10, %11, %12, %13 in 1 : vector<288x4xbf16>, vector<288x4xbf16>, vector<288x4xbf16>, vector<288x4xbf16>, vector<288x4xbf16>, vector<288x4xbf16>, vector<288x4xbf16>, vector<288x4xbf16>, vector<288x4xbf16> -> vector<288x36xbf16>
    %c0_1 = arith.constant 0 : index
    %c0_2 = arith.constant 0 : index
    %15 = vector.load %arg3[%c0_1, %c0_2] : memref<36x8xbf16, #tpu.memory_space<vmem>>, vector<36x8xbf16>
    %cst = arith.constant dense<0.000000e+00> : vector<288x8xf32>
    %16 = tpu.matmul %14, %15, %cst {dimension_numbers = #tpu.dot_dimension_numbers<[1], [0], [0], [1], [0, 0, 1, 1], [], []>} : vector<288x36xbf16>, vector<36x8xbf16>, vector<288x8xf32> -> vector<288x8xf32>
    %c0_3 = arith.constant 0 : index
    %c0_4 = arith.constant 0 : index
    %17 = vector.load %arg4[%c0_3, %c0_4] : memref<1x8xf32, #tpu.memory_space<vmem>>, vector<1x8xf32>
    %18 = vector.broadcast %17 : vector<1x8xf32> to vector<288x8xf32>
    %19 = arith.addf %16, %18 : vector<288x8xf32>
    %cst_5 = arith.constant 0.000000e+00 : f32
    %20 = vector.broadcast %cst_5 : f32 to vector<288x8xf32>
    %21 = arith.cmpf ogt, %19, %20 : vector<288x8xf32>
    %cst_6 = arith.constant 1.000000e-01 : f32
    %22 = vector.broadcast %cst_6 : f32 to vector<288x8xf32>
    %23 = arith.mulf %22, %19 : vector<288x8xf32>
    %24 = arith.select %21, %19, %23 : vector<288x8xi1>, vector<288x8xf32>
    %25 = arith.truncf %24 : vector<288x8xf32> to vector<288x8xbf16>
    %26 = tpu.concatenate %25, %25, %25, %25 in 1 : vector<288x8xbf16>, vector<288x8xbf16>, vector<288x8xbf16>, vector<288x8xbf16> -> vector<288x32xbf16>
    %c0_7 = arith.constant 0 : index
    %c0_8 = arith.constant 0 : index
    %c0_9 = arith.constant 0 : index
    %27 = vector.load %arg5[%c0_7, %c0_8, %c0_9] : memref<1x288x32xbf16, #tpu.memory_space<vmem>>, vector<1x288x32xbf16>
    %28 = vector.shape_cast %27 : vector<1x288x32xbf16> to vector<288x32xbf16>
    %29 = vector.shape_cast %26 : vector<288x32xbf16> to vector<1x288x32xbf16>
    tpu.vector_store %arg5[%c0_7, %c0_8, %c0_9], %29 {strides = array<i32>} : memref<1x288x32xbf16, #tpu.memory_space<vmem>>, vector<1x288x32xbf16>,
    return
  }
  func.func @transform_0(%arg0: i32, %arg1: i32) -> (i32, i32, i32) {
    %c0_i32 = arith.constant 0 : i32
    %c0_i32_0 = arith.constant 0 : i32
    %c0_i32_1 = arith.constant 0 : i32
    return %arg0, %c0_i32, %c0_i32_0 : i32, i32, i32
  }
  func.func @transform_1(%arg0: i32, %arg1: i32) -> (i32, i32) {
    %c0_i32 = arith.constant 0 : i32
    %c0_i32_0 = arith.constant 0 : i32
    %c0_i32_1 = arith.constant 0 : i32
    return %c0_i32, %c0_i32_0 : i32, i32
  }
  func.func @transform_2(%arg0: i32, %arg1: i32) -> (i32, i32) {
    %c0_i32 = arith.constant 0 : i32
    %c0_i32_0 = arith.constant 0 : i32
    %c0_i32_1 = arith.constant 0 : i32
    return %c0_i32, %c0_i32_0 : i32, i32
  }
  func.func @transform_3(%arg0: i32, %arg1: i32) -> (i32, i32, i32) {
    %c0_i32 = arith.constant 0 : i32
    %c0_i32_0 = arith.constant 0 : i32
    return %arg0, %arg1, %c0_i32 : i32, i32, i32
  }
}

</mosaic_0001>

<llo_original>
// kernel: tpu_custom_call.1
$region0: #{tpu_custom_call.1}
  #allocation0 [shape = 'u32[]', space=smem, size = 0x4, offset = 0x4, fixed_abs, tag = 'smem constant byte address 0x4 - core index']
  #allocation1 [shape = 'u32[144,128]{1,0:T(1,128)}', space=vmem, size = 0x12000, scoped, tag = 'internal scratch']
  %s0 = inlined_call_operand.vmem [shape: bf16[2,336,4], index: 0, kind: input, shape index: {}]
  %s1 = inlined_call_operand.vmem [shape: bf16[36,8], index: 1, kind: input, shape index: {}]
  %s2 = inlined_call_operand.vmem [shape: f32[1,8], index: 2, kind: input, shape index: {}]
  %s3 = inlined_call_operand.vmem [shape: bf16[2,288,32], index: 3, kind: output, shape index: {}]
  %s4 = sld [smem:[#allocation0]]
  $region45: #{tpu_custom_call.1} parent=0
    _
  %s6 = ssub.s32 1, %s4
  %s7 = scalar_select 0, %s6, %s4
  loop: start=0, step=1, limit=4
  $region2: #{tpu_custom_call.1} parent=0 // loop_pre_header
    _
  $region3: #{tpu_custom_call.1} parent=0 // loop_header
    %s9 = sphi 0, %s13
    %p10 = scmp.ge.s32.totalorder %s9, 4
    %s16 = sphi 0, %s28
    %s17 = sphi 0, %s24
    %s18 = sphi 0, %s16
    %s19 = sphi 0, %s17
    %s20 = sphi 0, %s18
    %s21 = sphi 0, %s19
    %s31 = sphi 0, %s33
    %s34 = sphi 0, %s31
    %s35 = sphi 0, %s34
    %s51 = sphi 0, %s35
    %s55 = sphi 0, %s55
    %s57 = sphi 0, %s55
    %s58 = sphi 0, %s57
    %s72 = sphi 0, %s58
    %s76 = sphi 0, %s76
    %s78 = sphi 0, %s76
    %s79 = sphi 0, %s78
    %s93 = sphi 0, %s79
    %s101 = sphi 0, %s103
    %s104 = sphi 0, %s101
    %s105 = sphi 0, %s104
    %s121 = sphi 0, %s105
  $region4: #{tpu_custom_call.1} parent=0 // loop_header_branch
    %12 = sbr.rel (%p10) target = $region8
  $region5: #{tpu_custom_call.1} parent=0 // loop_body
    %s14 = ssub.s32 %s9, 1
    %s15 = ssub.s32 %s9, 2
    %s22 = sadd.s32 1, %s17
    %p23 = scmp.ge.s32.totalorder %s22, 1
    %s24 = scalar_select %p23, 0, %s22
    %s25 = sadd.s32 1, %s16
    %s26 = scalar_select %p23, %s25, %s16
    %p27 = scmp.ge.s32.totalorder %s26, 2
    %s28 = scalar_select %p27, 0, %s26
    %s29 = ssub.s32 %s16, %s28
    %p30 = scmp.eq.s32.totalorder %s29, 0
    %s32 = sadd.s32 %s31, 1
    %s33 = scalar_select %p30, %s31, %s32
    %p36 = pneg %p30
    %p37 = scmp.eq.s32.totalorder %s9, 1
    %p38 = por %p36, %p37
    %p39 = scmp.ne.s32.totalorder %s31, %s34
    %p40 = scmp.eq.s32.totalorder %s9, 0
    %p41 = por %p39, %p40
    %p42 = scmp.ne.s32.totalorder %s31, %s34
    %p43 = scmp.eq.s32.totalorder %s14, 1
    %p44 = por %p42, %p43
    %p45 = scmp.ne.s32.totalorder %s34, %s35
    %p46 = scmp.eq.s32.totalorder %s14, 0
    %p47 = por %p45, %p46
    %p48 = scmp.ne.s32.totalorder %s34, %s35
    %p49 = scmp.eq.s32.totalorder %s15, 1
    %p50 = por %p48, %p49
    %p52 = scmp.ne.s32.totalorder %s35, %s51
    %p53 = scmp.eq.s32.totalorder %s15, 0
    %p54 = por %p52, %p53
    %s56 = sadd.s32 %s55, 1
    %p59 = scmp.eq.s32.totalorder %s9, 1
    %p60 = scmp.ne.s32.totalorder %s55, %s57
    %p61 = scmp.eq.s32.totalorder %s9, 0
    %p62 = por %p60, %p61
    %p63 = scmp.ne.s32.totalorder %s55, %s57
    %p64 = scmp.eq.s32.totalorder %s14, 1
    %p65 = por %p63, %p64
    %p66 = scmp.ne.s32.totalorder %s57, %s58
    %p67 = scmp.eq.s32.totalorder %s14, 0
    %p68 = por %p66, %p67
    %p69 = scmp.ne.s32.totalorder %s57, %s58
    %p70 = scmp.eq.s32.totalorder %s15, 1
    %p71 = por %p69, %p70
    %p73 = scmp.ne.s32.totalorder %s58, %s72
    %p74 = scmp.eq.s32.totalorder %s15, 0
    %p75 = por %p73, %p74
    %s77 = sadd.s32 %s76, 1
    %p80 = scmp.eq.s32.totalorder %s9, 1
    %p81 = scmp.ne.s32.totalorder %s76, %s78
    %p82 = scmp.eq.s32.totalorder %s9, 0
    %p83 = por %p81, %p82
    %p84 = scmp.ne.s32.totalorder %s76, %s78
    %p85 = scmp.eq.s32.totalorder %s14, 1
    %p86 = por %p84, %p85
    %p87 = scmp.ne.s32.totalorder %s78, %s79
    %p88 = scmp.eq.s32.totalorder %s14, 0
    %p89 = por %p87, %p88
    %p90 = scmp.ne.s32.totalorder %s78, %s79
    %p91 = scmp.eq.s32.totalorder %s15, 1
    %p92 = por %p90, %p91
    %p94 = scmp.ne.s32.totalorder %s79, %s93
    %p95 = scmp.eq.s32.totalorder %s15, 0
    %p96 = por %p94, %p95
    %s97 = ssub.s32 %s16, %s28
    %s98 = ssub.s32 %s17, %s24
    %s99 = sor.u32 %s97, %s98
    %p100 = scmp.eq.s32.totalorder %s99, 0
    %s102 = sadd.s32 %s101, 1
    %s103 = scalar_select %p100, %s101, %s102
    %p106 = pneg %p100
    %p107 = scmp.eq.s32.totalorder %s9, 1
    %p108 = por %p106, %p107
    %p109 = scmp.ne.s32.totalorder %s101, %s104
    %p110 = scmp.eq.s32.totalorder %s9, 0
    %p111 = por %p109, %p110
    %p112 = scmp.ne.s32.totalorder %s101, %s104
    %p113 = scmp.eq.s32.totalorder %s14, 1
    %p114 = por %p112, %p113
    %p115 = scmp.ne.s32.totalorder %s104, %s105
    %p116 = scmp.eq.s32.totalorder %s14, 0
    %p117 = por %p115, %p116
    %p118 = scmp.ne.s32.totalorder %s104, %s105
    %p119 = scmp.eq.s32.totalorder %s15, 1
    %p120 = por %p118, %p119
    %p122 = scmp.ne.s32.totalorder %s105, %s121
    %p123 = scmp.eq.s32.totalorder %s15, 0
    %p124 = por %p122, %p123
    %p125 = scmp.le.s32.totalorder 1, %s9
    %p126 = scmp.lt.s32.totalorder %s9, 3
    %p127 = pnand %p125, %p126
    %p128 = pneg %p127
    // Predicated region
    $region9: #{tpu_custom_call.1} parent=5 // pred_check
      _
    $region10: #{tpu_custom_call.1} parent=5 // pred_check_branch
      %130 = sbr.rel (%p127) target = $region12
    $region11: #{tpu_custom_call.1} parent=5 // pred_region
      %s131 = ssub.s32 %s9, 1
      // Predicated region
      $region13: #{tpu_custom_call.1} parent=11 // pred_check
        %p132 = pneg %p68
      $region14: #{tpu_custom_call.1} parent=11 // pred_check_branch
        %134 = sbr.rel (%p132) target = $region16
      $region15: #{tpu_custom_call.1} parent=11 // pred_region
        _
      $region16: #{tpu_custom_call.1} parent=11 // pred_fallthru
        _
      // Predicated region
      $region17: #{tpu_custom_call.1} parent=11 // pred_check
        %p135 = pneg %p89
      $region18: #{tpu_custom_call.1} parent=11 // pred_check_branch
        %137 = sbr.rel (%p135) target = $region20
      $region19: #{tpu_custom_call.1} parent=11 // pred_region
        _
      $region20: #{tpu_custom_call.1} parent=11 // pred_fallthru
        _
    $region12: #{tpu_custom_call.1} parent=5 // pred_fallthru
      _
    %p138 = scmp.lt.s32.totalorder %s9, 2
    // Predicated region
    $region21: #{tpu_custom_call.1} parent=5 // pred_check
      %p139 = pneg %p138
    $region22: #{tpu_custom_call.1} parent=5 // pred_check_branch
      %141 = sbr.rel (%p139) target = $region24
    $region23: #{tpu_custom_call.1} parent=5 // pred_region
      // Predicated region
      $region25: #{tpu_custom_call.1} parent=23 // pred_check
        %p142 = pneg %p41
      $region26: #{tpu_custom_call.1} parent=23 // pred_check_branch
        %144 = sbr.rel (%p142) target = $region28
      $region27: #{tpu_custom_call.1} parent=23 // pred_region
        %p145 = scmp.lt.s32.totalorder %s16, 1
        %s146 = scalar_select %p145, %s16, 1
        %s147 = smul.addr %s146, 42
        %s148 = smul.addr %s147, 4
        %s149 = scalar_lea.vmem %s0, %s148
      $region28: #{tpu_custom_call.1} parent=23 // pred_fallthru
        _
    $region24: #{tpu_custom_call.1} parent=5 // pred_fallthru
      _
    %p150 = scmp.le.s32.totalorder 1, %s9
    %p151 = scmp.lt.s32.totalorder %s9, 3
    %p152 = pnand %p150, %p151
    %p153 = pneg %p152
    // Predicated region
    $region29: #{tpu_custom_call.1} parent=5 // pred_check
      _
    $region30: #{tpu_custom_call.1} parent=5 // pred_check_branch
      %155 = sbr.rel (%p152) target = $region32
    $region31: #{tpu_custom_call.1} parent=5 // pred_region
      %s156 = ssub.s32 %s9, 1
      %p157 = scmp.lt.s32.totalorder %s18, 1
      %s158 = scalar_select %p157, %s18, 1
      %s159 = smul.addr %s158, 42
      %s160 = smul.addr %s159, 4
      %s161 = scalar_lea.vmem %s0, %s160
      %p162 = pneg %p47
      %p163 = pneg %p44
      %p164 = pneg %p68
      %p165 = pneg %p65
      %p166 = pneg %p89
      %p167 = pneg %p86
      %p168 = pneg %p117
      %p169 = pneg %p114
      %s170 = smul.u32 36, %s19
      %p171 = scmp.lt.s32.totalorder %s18, 1
      %s172 = scalar_select %p171, %s18, 1
      %p173 = scmp.lt.s32.totalorder %s170, 35
      %s174 = scalar_select %p173, %s170, 35
      %s175 = smul.addr %s172, 36
      %s176 = sadd.s32 %s174, %s175
      %s177 = smul.addr %s176, 4
      %s178 = scalar_lea.vmem %s3, %s177
      %p179 = scmp.lt.s32.totalorder %s18, 1
      %s180 = scalar_select %p179, %s18, 1
      %s181 = smul.addr %s180, 42
      %s182 = smul.addr %s181, 4
      %s183 = scalar_lea.vmem %s0, %s182
      %s184 = smul.u32 36, %s19
      %p185 = scmp.lt.s32.totalorder %s18, 1
      %s186 = scalar_select %p185, %s18, 1
      %p187 = scmp.lt.s32.totalorder %s184, 35
      %s188 = scalar_select %p187, %s184, 35
      %s189 = smul.addr %s186, 36
      %s190 = sadd.s32 %s188, %s189
      %s191 = smul.addr %s190, 4
      %s192 = scalar_lea.vmem %s3, %s191
      %s193 = smul.u32 36, %s19
      %s195 = smul.u32 %s19, 288
      %s196 = sshra.s32 %s195, 3
      %s197 = sand.u32 %s195, 7
      %s198 = smul.addr %s196, 4
      %s199 = scalar_lea.vmem %s183, %s198
      %v200 = vld [vmem:[%s199] sm:$0xf]
      %v201 = vld [vmem:[%s199 + $0x4] sm:$0xf]
      %v202 = vld [vmem:[%s199 + $0x8] sm:$0xf]
      %v203 = vld [vmem:[%s199 + $0xc] sm:$0xf]
      %v204 = vld [vmem:[%s199 + $0x10] sm:$0xf]
      %v205 = vld [vmem:[%s199 + $0x14] sm:$0xf]
      %v206 = vld [vmem:[%s199 + $0x18] sm:$0xf]
      %v207 = vld [vmem:[%s199 + $0x1c] sm:$0xf]
      %v208 = vld [vmem:[%s199 + $0x20] sm:$0xf]
      %v209 = vld [vmem:[%s199 + $0x24] sm:$0xf]
      %v210 = vld [vmem:[%s199 + $0x28] sm:$0xf]
      %v211 = vld [vmem:[%s199 + $0x2c] sm:$0xf]
      %v212 = vld [vmem:[%s199 + $0x30] sm:$0xf]
      %v213 = vld [vmem:[%s199 + $0x34] sm:$0xf]
      %v214 = vld [vmem:[%s199 + $0x38] sm:$0xf]
      %v215 = vld [vmem:[%s199 + $0x3c] sm:$0xf]
      %v216 = vld [vmem:[%s199 + $0x40] sm:$0xf]
      %v217 = vld [vmem:[%s199 + $0x44] sm:$0xf]
      %v218 = vld [vmem:[%s199 + $0x48] sm:$0xf]
      %v219 = vld [vmem:[%s199 + $0x4c] sm:$0xf]
      %v220 = vld [vmem:[%s199 + $0x50] sm:$0xf]
      %v221 = vld [vmem:[%s199 + $0x54] sm:$0xf]
      %v222 = vld [vmem:[%s199 + $0x58] sm:$0xf]
      %v223 = vld [vmem:[%s199 + $0x5c] sm:$0xf]
      %v224 = vld [vmem:[%s199 + $0x60] sm:$0xf]
      %v225 = vld [vmem:[%s199 + $0x64] sm:$0xf]
      %v226 = vld [vmem:[%s199 + $0x68] sm:$0xf]
      %v227 = vld [vmem:[%s199 + $0x6c] sm:$0xf]
      %v228 = vld [vmem:[%s199 + $0x70] sm:$0xf]
      %v229 = vld [vmem:[%s199 + $0x74] sm:$0xf]
      %v230 = vld [vmem:[%s199 + $0x78] sm:$0xf]
      %v231 = vld [vmem:[%s199 + $0x7c] sm:$0xf]
      %v232 = vld [vmem:[%s199 + $0x80] sm:$0xf]
      %v233 = vld [vmem:[%s199 + $0x84] sm:$0xf]
      %v234 = vld [vmem:[%s199 + $0x88] sm:$0xf]
      %v235 = vld [vmem:[%s199 + $0x8c] sm:$0xf]
      %v236 = vld [vmem:[%s199 + $0x90] sm:$0xf]
      %v237 = vld [vmem:[%s199 + $0x94] sm:$0xf]
      %v238 = vld [vmem:[%s199 + $0x98] sm:$0xf]
      %v239 = vld [vmem:[%s199 + $0x9c] sm:$0xf]
      %v240 = vld [vmem:[%s199 + $0xa0] sm:$0xf]
      %v277 = vunpack.c.l.b16 %v200
      %v278 = vunpack.c.l.b16 %v201
      %v279 = vunpack.c.l.b16 %v202
      %v280 = vunpack.c.l.b16 %v203
      %v281 = vunpack.c.l.b16 %v204
      %v282 = vunpack.c.l.b16 %v205
      %v283 = vunpack.c.l.b16 %v206
      %v284 = vunpack.c.l.b16 %v207
      %v285 = vunpack.c.l.b16 %v208
      %v286 = vunpack.c.l.b16 %v209
      %v287 = vunpack.c.l.b16 %v210
      %v288 = vunpack.c.l.b16 %v211
      %v289 = vunpack.c.l.b16 %v212
      %v290 = vunpack.c.l.b16 %v213
      %v291 = vunpack.c.l.b16 %v214
      %v292 = vunpack.c.l.b16 %v215
      %v293 = vunpack.c.l.b16 %v216
      %v294 = vunpack.c.l.b16 %v217
      %v295 = vunpack.c.l.b16 %v218
      %v296 = vunpack.c.l.b16 %v219
      %v297 = vunpack.c.l.b16 %v220
      %v298 = vunpack.c.l.b16 %v221
      %v299 = vunpack.c.l.b16 %v222
      %v300 = vunpack.c.l.b16 %v223
      %v301 = vunpack.c.l.b16 %v224
      %v302 = vunpack.c.l.b16 %v225
      %v303 = vunpack.c.l.b16 %v226
      %v304 = vunpack.c.l.b16 %v227
      %v305 = vunpack.c.l.b16 %v228
      %v306 = vunpack.c.l.b16 %v229
      %v307 = vunpack.c.l.b16 %v230
      %v308 = vunpack.c.l.b16 %v231
      %v309 = vunpack.c.l.b16 %v232
      %v310 = vunpack.c.l.b16 %v233
      %v311 = vunpack.c.l.b16 %v234
      %v312 = vunpack.c.l.b16 %v235
      %v313 = vpack.c.b16 %v278, %v277
      %v314 = vpack.c.b16 %v280, %v279
      %v315 = vpack.c.b16 %v282, %v281
      %v316 = vpack.c.b16 %v284, %v283
      %v317 = vpack.c.b16 %v286, %v285
      %v318 = vpack.c.b16 %v288, %v287
      %v319 = vpack.c.b16 %v290, %v289
      %v320 = vpack.c.b16 %v292, %v291
      %v321 = vpack.c.b16 %v294, %v293
      %v322 = vpack.c.b16 %v296, %v295
      %v323 = vpack.c.b16 %v298, %v297
      %v324 = vpack.c.b16 %v300, %v299
      %v325 = vpack.c.b16 %v302, %v301
      %v326 = vpack.c.b16 %v304, %v303
      %v327 = vpack.c.b16 %v306, %v305
      %v328 = vpack.c.b16 %v308, %v307
      %v329 = vpack.c.b16 %v310, %v309
      %v330 = vpack.c.b16 %v312, %v311
      %v332 = vunpack.c.l.b16 %v236
      %v333 = vpack.c.b16 %v332, %v332
      %vm334 = vsmask.f32 7424
      %v336 = vshrl.u32 %v313, 16
      %v338 = vshll.u32 %v313, 16
      %v340 = vrot.slane %v338, 1
      %v341 = vor.u32 %v336, %v340
      %v343 = vshll.u32 %v314, 16
      %v345 = vrot.slane %v343, 1
      %v346 = vsel %vm334, %v341, %v345
      %v347 = vshrl.u32 %v314, 16
      %v349 = vor.u32 %v347, %v345
      %v351 = vshll.u32 %v315, 16
      %v353 = vrot.slane %v351, 1
      %v354 = vsel %vm334, %v349, %v353
      %v355 = vshrl.u32 %v315, 16
      %v357 = vor.u32 %v355, %v353
      %v359 = vshll.u32 %v316, 16
      %v361 = vrot.slane %v359, 1
      %v362 = vsel %vm334, %v357, %v361
      %v363 = vshrl.u32 %v316, 16
      %v365 = vor.u32 %v363, %v361
      %v367 = vshll.u32 %v317, 16
      %v369 = vrot.slane %v367, 1
      %v370 = vsel %vm334, %v365, %v369
      %v371 = vshrl.u32 %v317, 16
      %v373 = vor.u32 %v371, %v369
      %v375 = vshll.u32 %v318, 16
      %v377 = vrot.slane %v375, 1
      %v378 = vsel %vm334, %v373, %v377
      %v379 = vshrl.u32 %v318, 16
      %v381 = vor.u32 %v379, %v377
      %v383 = vshll.u32 %v319, 16
      %v385 = vrot.slane %v383, 1
      %v386 = vsel %vm334, %v381, %v385
      %v387 = vshrl.u32 %v319, 16
      %v389 = vor.u32 %v387, %v385
      %v391 = vshll.u32 %v320, 16
      %v393 = vrot.slane %v391, 1
      %v394 = vsel %vm334, %v389, %v393
      %v395 = vshrl.u32 %v320, 16
      %v397 = vor.u32 %v395, %v393
      %v399 = vshll.u32 %v321, 16
      %v401 = vrot.slane %v399, 1
      %v402 = vsel %vm334, %v397, %v401
      %v403 = vshrl.u32 %v321, 16
      %v405 = vor.u32 %v403, %v401
      %v407 = vshll.u32 %v322, 16
      %v409 = vrot.slane %v407, 1
      %v410 = vsel %vm334, %v405, %v409
      %v411 = vshrl.u32 %v322, 16
      %v413 = vor.u32 %v411, %v409
      %v415 = vshll.u32 %v323, 16
      %v417 = vrot.slane %v415, 1
      %v418 = vsel %vm334, %v413, %v417
      %v419 = vshrl.u32 %v323, 16
      %v421 = vor.u32 %v419, %v417
      %v423 = vshll.u32 %v324, 16
      %v425 = vrot.slane %v423, 1
      %v426 = vsel %vm334, %v421, %v425
      %v427 = vshrl.u32 %v324, 16
      %v429 = vor.u32 %v427, %v425
      %v431 = vshll.u32 %v325, 16
      %v433 = vrot.slane %v431, 1
      %v434 = vsel %vm334, %v429, %v433
      %v435 = vshrl.u32 %v325, 16
      %v437 = vor.u32 %v435, %v433
      %v439 = vshll.u32 %v326, 16
      %v441 = vrot.slane %v439, 1
      %v442 = vsel %vm334, %v437, %v441
      %v443 = vshrl.u32 %v326, 16
      %v445 = vor.u32 %v443, %v441
      %v447 = vshll.u32 %v327, 16
      %v449 = vrot.slane %v447, 1
      %v450 = vsel %vm334, %v445, %v449
      %v451 = vshrl.u32 %v327, 16
      %v453 = vor.u32 %v451, %v449
      %v455 = vshll.u32 %v328, 16
      %v457 = vrot.slane %v455, 1
      %v458 = vsel %vm334, %v453, %v457
      %v459 = vshrl.u32 %v328, 16
      %v461 = vor.u32 %v459, %v457
      %v463 = vshll.u32 %v329, 16
      %v465 = vrot.slane %v463, 1
      %v466 = vsel %vm334, %v461, %v465
      %v467 = vshrl.u32 %v329, 16
      %v469 = vor.u32 %v467, %v465
      %v471 = vshll.u32 %v330, 16
      %v473 = vrot.slane %v471, 1
      %v474 = vsel %vm334, %v469, %v473
      %v475 = vshrl.u32 %v330, 16
      %v477 = vor.u32 %v475, %v473
      %v479 = vshll.u32 %v333, 16
      %v481 = vrot.slane %v479, 1
      %v482 = vsel %vm334, %v477, %v481
      %483 = vrot.lane.b32.xlu0 %v346, 4
      %v484 = vpop.permute.xlu0 %483
      %485 = vrot.lane.b32.xlu0 %v354, 4
      %v486 = vpop.permute.xlu0 %485
      %487 = vrot.lane.b32.xlu0 %v362, 4
      %v488 = vpop.permute.xlu0 %487
      %489 = vrot.lane.b32.xlu0 %v370, 4
      %v490 = vpop.permute.xlu0 %489
      %491 = vrot.lane.b32.xlu0 %v378, 4
      %v492 = vpop.permute.xlu0 %491
      %493 = vrot.lane.b32.xlu0 %v386, 4
      %v494 = vpop.permute.xlu0 %493
      %495 = vrot.lane.b32.xlu0 %v394, 4
      %v496 = vpop.permute.xlu0 %495
      %497 = vrot.lane.b32.xlu0 %v402, 4
      %v498 = vpop.permute.xlu0 %497
      %499 = vrot.lane.b32.xlu0 %v410, 4
      %v500 = vpop.permute.xlu0 %499
      %501 = vrot.lane.b32.xlu0 %v418, 4
      %v502 = vpop.permute.xlu0 %501
      %503 = vrot.lane.b32.xlu0 %v426, 4
      %v504 = vpop.permute.xlu0 %503
      %505 = vrot.lane.b32.xlu0 %v434, 4
      %v506 = vpop.permute.xlu0 %505
      %507 = vrot.lane.b32.xlu0 %v442, 4
      %v508 = vpop.permute.xlu0 %507
      %509 = vrot.lane.b32.xlu0 %v450, 4
      %v510 = vpop.permute.xlu0 %509
      %511 = vrot.lane.b32.xlu0 %v458, 4
      %v512 = vpop.permute.xlu0 %511
      %513 = vrot.lane.b32.xlu0 %v466, 4
      %v514 = vpop.permute.xlu0 %513
      %515 = vrot.lane.b32.xlu0 %v474, 4
      %v516 = vpop.permute.xlu0 %515
      %517 = vrot.lane.b32.xlu0 %v482, 4
      %v518 = vpop.permute.xlu0 %517
      %vm519 = vcmask 1046528
      %v520 = vrot.slane %v313, 1
      %v521 = vrot.slane %v314, 1
      %v522 = vsel %vm519, %v520, %v521
      %v523 = vrot.slane %v315, 1
      %v524 = vsel %vm519, %v521, %v523
      %v525 = vrot.slane %v316, 1
      %v526 = vsel %vm519, %v523, %v525
      %v527 = vrot.slane %v317, 1
      %v528 = vsel %vm519, %v525, %v527
      %v529 = vrot.slane %v318, 1
      %v530 = vsel %vm519, %v527, %v529
      %v531 = vrot.slane %v319, 1
      %v532 = vsel %vm519, %v529, %v531
      %v533 = vrot.slane %v320, 1
      %v534 = vsel %vm519, %v531, %v533
      %v535 = vrot.slane %v321, 1
      %v536 = vsel %vm519, %v533, %v535
      %v537 = vrot.slane %v322, 1
      %v538 = vsel %vm519, %v535, %v537
      %v539 = vrot.slane %v323, 1
      %v540 = vsel %vm519, %v537, %v539
      %v541 = vrot.slane %v324, 1
      %v542 = vsel %vm519, %v539, %v541
      %v543 = vrot.slane %v325, 1
      %v544 = vsel %vm519, %v541, %v543
      %v545 = vrot.slane %v326, 1
      %v546 = vsel %vm519, %v543, %v545
      %v547 = vrot.slane %v327, 1
      %v548 = vsel %vm519, %v545, %v547
      %v549 = vrot.slane %v328, 1
      %v550 = vsel %vm519, %v547, %v549
      %v551 = vrot.slane %v329, 1
      %v552 = vsel %vm519, %v549, %v551
      %v553 = vrot.slane %v330, 1
      %v554 = vsel %vm519, %v551, %v553
      %v555 = vrot.slane %v333, 1
      %v556 = vsel %vm519, %v553, %v555
      %557 = vrot.lane.b32.xlu0 %v522, 8
      %v558 = vpop.permute.xlu0 %557
      %559 = vrot.lane.b32.xlu0 %v524, 8
      %v560 = vpop.permute.xlu0 %559
      %561 = vrot.lane.b32.xlu0 %v526, 8
      %v562 = vpop.permute.xlu0 %561
      %563 = vrot.lane.b32.xlu0 %v528, 8
      %v564 = vpop.permute.xlu0 %563
      %565 = vrot.lane.b32.xlu0 %v530, 8
      %v566 = vpop.permute.xlu0 %565
      %567 = vrot.lane.b32.xlu0 %v532, 8
      %v568 = vpop.permute.xlu0 %567
      %569 = vrot.lane.b32.xlu0 %v534, 8
      %v570 = vpop.permute.xlu0 %569
      %571 = vrot.lane.b32.xlu0 %v536, 8
      %v572 = vpop.permute.xlu0 %571
      %573 = vrot.lane.b32.xlu0 %v538, 8
      %v574 = vpop.permute.xlu0 %573
      %575 = vrot.lane.b32.xlu0 %v540, 8
      %v576 = vpop.permute.xlu0 %575
      %577 = vrot.lane.b32.xlu0 %v542, 8
      %v578 = vpop.permute.xlu0 %577
      %579 = vrot.lane.b32.xlu0 %v544, 8
      %v580 = vpop.permute.xlu0 %579
      %581 = vrot.lane.b32.xlu0 %v546, 8
      %v582 = vpop.permute.xlu0 %581
      %583 = vrot.lane.b32.xlu0 %v548, 8
      %v584 = vpop.permute.xlu0 %583
      %585 = vrot.lane.b32.xlu0 %v550, 8
      %v586 = vpop.permute.xlu0 %585
      %587 = vrot.lane.b32.xlu0 %v552, 8
      %v588 = vpop.permute.xlu0 %587
      %589 = vrot.lane.b32.xlu0 %v554, 8
      %v590 = vpop.permute.xlu0 %589
      %591 = vrot.lane.b32.xlu0 %v556, 8
      %v592 = vpop.permute.xlu0 %591
      %v595 = vunpack.c.l.b16 %v237
      %v596 = vunpack.c.l.b16 %v238
      %v597 = vpack.c.b16 %v595, %v332
      %v598 = vpack.c.b16 %v596, %v596
      %v599 = vrot.slane %v597, 1
      %v600 = vsel %vm519, %v553, %v599
      %v601 = vrot.slane %v598, 1
      %v602 = vsel %vm519, %v599, %v601
      %603 = vrot.lane.b32.xlu0 %v524, 12
      %v604 = vpop.permute.xlu0 %603
      %605 = vrot.lane.b32.xlu0 %v526, 12
      %v606 = vpop.permute.xlu0 %605
      %607 = vrot.lane.b32.xlu0 %v528, 12
      %v608 = vpop.permute.xlu0 %607
      %609 = vrot.lane.b32.xlu0 %v530, 12
      %v610 = vpop.permute.xlu0 %609
      %611 = vrot.lane.b32.xlu0 %v532, 12
      %v612 = vpop.permute.xlu0 %611
      %613 = vrot.lane.b32.xlu0 %v534, 12
      %v614 = vpop.permute.xlu0 %613
      %615 = vrot.lane.b32.xlu0 %v536, 12
      %v616 = vpop.permute.xlu0 %615
      %617 = vrot.lane.b32.xlu0 %v538, 12
      %v618 = vpop.permute.xlu0 %617
      %619 = vrot.lane.b32.xlu0 %v540, 12
      %v620 = vpop.permute.xlu0 %619
      %621 = vrot.lane.b32.xlu0 %v542, 12
      %v622 = vpop.permute.xlu0 %621
      %623 = vrot.lane.b32.xlu0 %v544, 12
      %v624 = vpop.permute.xlu0 %623
      %625 = vrot.lane.b32.xlu0 %v546, 12
      %v626 = vpop.permute.xlu0 %625
      %627 = vrot.lane.b32.xlu0 %v548, 12
      %v628 = vpop.permute.xlu0 %627
      %629 = vrot.lane.b32.xlu0 %v550, 12
      %v630 = vpop.permute.xlu0 %629
      %631 = vrot.lane.b32.xlu0 %v552, 12
      %v632 = vpop.permute.xlu0 %631
      %633 = vrot.lane.b32.xlu0 %v554, 12
      %v634 = vpop.permute.xlu0 %633
      %635 = vrot.lane.b32.xlu0 %v600, 12
      %v636 = vpop.permute.xlu0 %635
      %637 = vrot.lane.b32.xlu0 %v602, 12
      %v638 = vpop.permute.xlu0 %637
      %vm639 = vsmask.f32 6400
      %v640 = vrot.slane %v347, 1
      %v641 = vrot.slane %v343, 2
      %v642 = vor.u32 %v640, %v641
      %v643 = vrot.slane %v355, 1
      %v644 = vrot.slane %v351, 2
      %v645 = vor.u32 %v643, %v644
      %v646 = vsel %vm639, %v642, %v645
      %v647 = vrot.slane %v363, 1
      %v648 = vrot.slane %v359, 2
      %v649 = vor.u32 %v647, %v648
      %v650 = vsel %vm639, %v645, %v649
      %v651 = vrot.slane %v371, 1
      %v652 = vrot.slane %v367, 2
      %v653 = vor.u32 %v651, %v652
      %v654 = vsel %vm639, %v649, %v653
      %v655 = vrot.slane %v379, 1
      %v656 = vrot.slane %v375, 2
      %v657 = vor.u32 %v655, %v656
      %v658 = vsel %vm639, %v653, %v657
      %v659 = vrot.slane %v387, 1
      %v660 = vrot.slane %v383, 2
      %v661 = vor.u32 %v659, %v660
      %v662 = vsel %vm639, %v657, %v661
      %v663 = vrot.slane %v395, 1
      %v664 = vrot.slane %v391, 2
      %v665 = vor.u32 %v663, %v664
      %v666 = vsel %vm639, %v661, %v665
      %v667 = vrot.slane %v403, 1
      %v668 = vrot.slane %v399, 2
      %v669 = vor.u32 %v667, %v668
      %v670 = vsel %vm639, %v665, %v669
      %v671 = vrot.slane %v411, 1
      %v672 = vrot.slane %v407, 2
      %v673 = vor.u32 %v671, %v672
      %v674 = vsel %vm639, %v669, %v673
      %v675 = vrot.slane %v419, 1
      %v676 = vrot.slane %v415, 2
      %v677 = vor.u32 %v675, %v676
      %v678 = vsel %vm639, %v673, %v677
      %v679 = vrot.slane %v427, 1
      %v680 = vrot.slane %v423, 2
      %v681 = vor.u32 %v679, %v680
      %v682 = vsel %vm639, %v677, %v681
      %v683 = vrot.slane %v435, 1
      %v684 = vrot.slane %v431, 2
      %v685 = vor.u32 %v683, %v684
      %v686 = vsel %vm639, %v681, %v685
      %v687 = vrot.slane %v443, 1
      %v688 = vrot.slane %v439, 2
      %v689 = vor.u32 %v687, %v688
      %v690 = vsel %vm639, %v685, %v689
      %v691 = vrot.slane %v451, 1
      %v692 = vrot.slane %v447, 2
      %v693 = vor.u32 %v691, %v692
      %v694 = vsel %vm639, %v689, %v693
      %v695 = vrot.slane %v459, 1
      %v696 = vrot.slane %v455, 2
      %v697 = vor.u32 %v695, %v696
      %v698 = vsel %vm639, %v693, %v697
      %v699 = vrot.slane %v467, 1
      %v700 = vrot.slane %v463, 2
      %v701 = vor.u32 %v699, %v700
      %v702 = vsel %vm639, %v697, %v701
      %v703 = vrot.slane %v475, 1
      %v704 = vrot.slane %v471, 2
      %v705 = vor.u32 %v703, %v704
      %v706 = vsel %vm639, %v701, %v705
      %v708 = vshrl.u32 %v597, 16
      %v710 = vrot.slane %v708, 1
      %v711 = vshll.u32 %v597, 16
      %v713 = vrot.slane %v711, 2
      %v714 = vor.u32 %v710, %v713
      %v715 = vsel %vm639, %v705, %v714
      %v717 = vshrl.u32 %v598, 16
      %v719 = vrot.slane %v717, 1
      %v720 = vshll.u32 %v598, 16
      %v722 = vrot.slane %v720, 2
      %v723 = vor.u32 %v719, %v722
      %v724 = vsel %vm639, %v714, %v723
      %725 = vrot.lane.b32.xlu0 %v646, 16
      %v726 = vpop.permute.xlu0 %725
      %727 = vrot.lane.b32.xlu0 %v650, 16
      %v728 = vpop.permute.xlu0 %727
      %729 = vrot.lane.b32.xlu0 %v654, 16
      %v730 = vpop.permute.xlu0 %729
      %731 = vrot.lane.b32.xlu0 %v658, 16
      %v732 = vpop.permute.xlu0 %731
      %733 = vrot.lane.b32.xlu0 %v662, 16
      %v734 = vpop.permute.xlu0 %733
      %735 = vrot.lane.b32.xlu0 %v666, 16
      %v736 = vpop.permute.xlu0 %735
      %737 = vrot.lane.b32.xlu0 %v670, 16
      %v738 = vpop.permute.xlu0 %737
      %739 = vrot.lane.b32.xlu0 %v674, 16
      %v740 = vpop.permute.xlu0 %739
      %741 = vrot.lane.b32.xlu0 %v678, 16
      %v742 = vpop.permute.xlu0 %741
      %743 = vrot.lane.b32.xlu0 %v682, 16
      %v744 = vpop.permute.xlu0 %743
      %745 = vrot.lane.b32.xlu0 %v686, 16
      %v746 = vpop.permute.xlu0 %745
      %747 = vrot.lane.b32.xlu0 %v690, 16
      %v748 = vpop.permute.xlu0 %747
      %749 = vrot.lane.b32.xlu0 %v694, 16
      %v750 = vpop.permute.xlu0 %749
      %751 = vrot.lane.b32.xlu0 %v698, 16
      %v752 = vpop.permute.xlu0 %751
      %753 = vrot.lane.b32.xlu0 %v702, 16
      %v754 = vpop.permute.xlu0 %753
      %755 = vrot.lane.b32.xlu0 %v706, 16
      %v756 = vpop.permute.xlu0 %755
      %757 = vrot.lane.b32.xlu0 %v715, 16
      %v758 = vpop.permute.xlu0 %757
      %759 = vrot.lane.b32.xlu0 %v724, 16
      %v760 = vpop.permute.xlu0 %759
      %vm761 = vcmask 1045504
      %v762 = vrot.slane %v314, 2
      %v763 = vrot.slane %v315, 2
      %v764 = vsel %vm761, %v762, %v763
      %v765 = vrot.slane %v316, 2
      %v766 = vsel %vm761, %v763, %v765
      %v767 = vrot.slane %v317, 2
      %v768 = vsel %vm761, %v765, %v767
      %v769 = vrot.slane %v318, 2
      %v770 = vsel %vm761, %v767, %v769
      %v771 = vrot.slane %v319, 2
      %v772 = vsel %vm761, %v769, %v771
      %v773 = vrot.slane %v320, 2
      %v774 = vsel %vm761, %v771, %v773
      %v775 = vrot.slane %v321, 2
      %v776 = vsel %vm761, %v773, %v775
      %v777 = vrot.slane %v322, 2
      %v778 = vsel %vm761, %v775, %v777
      %v779 = vrot.slane %v323, 2
      %v780 = vsel %vm761, %v777, %v779
      %v781 = vrot.slane %v324, 2
      %v782 = vsel %vm761, %v779, %v781
      %v783 = vrot.slane %v325, 2
      %v784 = vsel %vm761, %v781, %v783
      %v785 = vrot.slane %v326, 2
      %v786 = vsel %vm761, %v783, %v785
      %v787 = vrot.slane %v327, 2
      %v788 = vsel %vm761, %v785, %v787
      %v789 = vrot.slane %v328, 2
      %v790 = vsel %vm761, %v787, %v789
      %v791 = vrot.slane %v329, 2
      %v792 = vsel %vm761, %v789, %v791
      %v793 = vrot.slane %v330, 2
      %v794 = vsel %vm761, %v791, %v793
      %v795 = vrot.slane %v597, 2
      %v796 = vsel %vm761, %v793, %v795
      %v797 = vrot.slane %v598, 2
      %v798 = vsel %vm761, %v795, %v797
      %799 = vrot.lane.b32.xlu0 %v764, 20
      %v800 = vpop.permute.xlu0 %799
      %801 = vrot.lane.b32.xlu0 %v766, 20
      %v802 = vpop.permute.xlu0 %801
      %803 = vrot.lane.b32.xlu0 %v768, 20
      %v804 = vpop.permute.xlu0 %803
      %805 = vrot.lane.b32.xlu0 %v770, 20
      %v806 = vpop.permute.xlu0 %805
      %807 = vrot.lane.b32.xlu0 %v772, 20
      %v808 = vpop.permute.xlu0 %807
      %809 = vrot.lane.b32.xlu0 %v774, 20
      %v810 = vpop.permute.xlu0 %809
      %811 = vrot.lane.b32.xlu0 %v776, 20
      %v812 = vpop.permute.xlu0 %811
      %813 = vrot.lane.b32.xlu0 %v778, 20
      %v814 = vpop.permute.xlu0 %813
      %815 = vrot.lane.b32.xlu0 %v780, 20
      %v816 = vpop.permute.xlu0 %815
      %817 = vrot.lane.b32.xlu0 %v782, 20
      %v818 = vpop.permute.xlu0 %817
      %819 = vrot.lane.b32.xlu0 %v784, 20
      %v820 = vpop.permute.xlu0 %819
      %821 = vrot.lane.b32.xlu0 %v786, 20
      %v822 = vpop.permute.xlu0 %821
      %823 = vrot.lane.b32.xlu0 %v788, 20
      %v824 = vpop.permute.xlu0 %823
      %825 = vrot.lane.b32.xlu0 %v790, 20
      %v826 = vpop.permute.xlu0 %825
      %827 = vrot.lane.b32.xlu0 %v792, 20
      %v828 = vpop.permute.xlu0 %827
      %829 = vrot.lane.b32.xlu0 %v794, 20
      %v830 = vpop.permute.xlu0 %829
      %831 = vrot.lane.b32.xlu0 %v796, 20
      %v832 = vpop.permute.xlu0 %831
      %833 = vrot.lane.b32.xlu0 %v798, 20
      %v834 = vpop.permute.xlu0 %833
      %v837 = vunpack.c.l.b16 %v239
      %v838 = vunpack.c.l.b16 %v240
      %v839 = vpack.c.b16 %v837, %v596
      %v840 = vpack.c.b16 %v838, %v838
      %v841 = vrot.slane %v839, 2
      %v842 = vsel %vm761, %v795, %v841
      %v843 = vrot.slane %v840, 2
      %v844 = vsel %vm761, %v841, %v843
      %845 = vrot.lane.b32.xlu0 %v766, 24
      %v846 = vpop.permute.xlu0 %845
      %847 = vrot.lane.b32.xlu0 %v768, 24
      %v848 = vpop.permute.xlu0 %847
      %849 = vrot.lane.b32.xlu0 %v770, 24
      %v850 = vpop.permute.xlu0 %849
      %851 = vrot.lane.b32.xlu0 %v772, 24
      %v852 = vpop.permute.xlu0 %851
      %853 = vrot.lane.b32.xlu0 %v774, 24
      %v854 = vpop.permute.xlu0 %853
      %855 = vrot.lane.b32.xlu0 %v776, 24
      %v856 = vpop.permute.xlu0 %855
      %857 = vrot.lane.b32.xlu0 %v778, 24
      %v858 = vpop.permute.xlu0 %857
      %859 = vrot.lane.b32.xlu0 %v780, 24
      %v860 = vpop.permute.xlu0 %859
      %861 = vrot.lane.b32.xlu0 %v782, 24
      %v862 = vpop.permute.xlu0 %861
      %863 = vrot.lane.b32.xlu0 %v784, 24
      %v864 = vpop.permute.xlu0 %863
      %865 = vrot.lane.b32.xlu0 %v786, 24
      %v866 = vpop.permute.xlu0 %865
      %867 = vrot.lane.b32.xlu0 %v788, 24
      %v868 = vpop.permute.xlu0 %867
      %869 = vrot.lane.b32.xlu0 %v790, 24
      %v870 = vpop.permute.xlu0 %869
      %871 = vrot.lane.b32.xlu0 %v792, 24
      %v872 = vpop.permute.xlu0 %871
      %873 = vrot.lane.b32.xlu0 %v794, 24
      %v874 = vpop.permute.xlu0 %873
      %875 = vrot.lane.b32.xlu0 %v796, 24
      %v876 = vpop.permute.xlu0 %875
      %877 = vrot.lane.b32.xlu0 %v842, 24
      %v878 = vpop.permute.xlu0 %877
      %879 = vrot.lane.b32.xlu0 %v844, 24
      %v880 = vpop.permute.xlu0 %879
      %vm881 = vsmask.f32 5376
      %v882 = vrot.slane %v355, 2
      %v883 = vrot.slane %v351, 3
      %v884 = vor.u32 %v882, %v883
      %v885 = vrot.slane %v363, 2
      %v886 = vrot.slane %v359, 3
      %v887 = vor.u32 %v885, %v886
      %v888 = vsel %vm881, %v884, %v887
      %v889 = vrot.slane %v371, 2
      %v890 = vrot.slane %v367, 3
      %v891 = vor.u32 %v889, %v890
      %v892 = vsel %vm881, %v887, %v891
      %v893 = vrot.slane %v379, 2
      %v894 = vrot.slane %v375, 3
      %v895 = vor.u32 %v893, %v894
      %v896 = vsel %vm881, %v891, %v895
      %v897 = vrot.slane %v387, 2
      %v898 = vrot.slane %v383, 3
      %v899 = vor.u32 %v897, %v898
      %v900 = vsel %vm881, %v895, %v899
      %v901 = vrot.slane %v395, 2
      %v902 = vrot.slane %v391, 3
      %v903 = vor.u32 %v901, %v902
      %v904 = vsel %vm881, %v899, %v903
      %v905 = vrot.slane %v403, 2
      %v906 = vrot.slane %v399, 3
      %v907 = vor.u32 %v905, %v906
      %v908 = vsel %vm881, %v903, %v907
      %v909 = vrot.slane %v411, 2
      %v910 = vrot.slane %v407, 3
      %v911 = vor.u32 %v909, %v910
      %v912 = vsel %vm881, %v907, %v911
      %v913 = vrot.slane %v419, 2
      %v914 = vrot.slane %v415, 3
      %v915 = vor.u32 %v913, %v914
      %v916 = vsel %vm881, %v911, %v915
      %v917 = vrot.slane %v427, 2
      %v918 = vrot.slane %v423, 3
      %v919 = vor.u32 %v917, %v918
      %v920 = vsel %vm881, %v915, %v919
      %v921 = vrot.slane %v435, 2
      %v922 = vrot.slane %v431, 3
      %v923 = vor.u32 %v921, %v922
      %v924 = vsel %vm881, %v919, %v923
      %v925 = vrot.slane %v443, 2
      %v926 = vrot.slane %v439, 3
      %v927 = vor.u32 %v925, %v926
      %v928 = vsel %vm881, %v923, %v927
      %v929 = vrot.slane %v451, 2
      %v930 = vrot.slane %v447, 3
      %v931 = vor.u32 %v929, %v930
      %v932 = vsel %vm881, %v927, %v931
      %v933 = vrot.slane %v459, 2
      %v934 = vrot.slane %v455, 3
      %v935 = vor.u32 %v933, %v934
      %v936 = vsel %vm881, %v931, %v935
      %v937 = vrot.slane %v467, 2
      %v938 = vrot.slane %v463, 3
      %v939 = vor.u32 %v937, %v938
      %v940 = vsel %vm881, %v935, %v939
      %v941 = vrot.slane %v475, 2
      %v942 = vrot.slane %v471, 3
      %v943 = vor.u32 %v941, %v942
      %v944 = vsel %vm881, %v939, %v943
      %v945 = vrot.slane %v708, 2
      %v946 = vrot.slane %v711, 3
      %v947 = vor.u32 %v945, %v946
      %v948 = vsel %vm881, %v943, %v947
      %v950 = vshrl.u32 %v839, 16
      %v952 = vrot.slane %v950, 2
      %v953 = vshll.u32 %v839, 16
      %v955 = vrot.slane %v953, 3
      %v956 = vor.u32 %v952, %v955
      %v957 = vsel %vm881, %v947, %v956
      %v959 = vshrl.u32 %v840, 16
      %v961 = vrot.slane %v959, 2
      %v962 = vshll.u32 %v840, 16
      %v964 = vrot.slane %v962, 3
      %v965 = vor.u32 %v961, %v964
      %v966 = vsel %vm881, %v956, %v965
      %967 = vrot.lane.b32.xlu0 %v888, 28
      %v968 = vpop.permute.xlu0 %967
      %969 = vrot.lane.b32.xlu0 %v892, 28
      %v970 = vpop.permute.xlu0 %969
      %971 = vrot.lane.b32.xlu0 %v896, 28
      %v972 = vpop.permute.xlu0 %971
      %973 = vrot.lane.b32.xlu0 %v900, 28
      %v974 = vpop.permute.xlu0 %973
      %975 = vrot.lane.b32.xlu0 %v904, 28
      %v976 = vpop.permute.xlu0 %975
      %977 = vrot.lane.b32.xlu0 %v908, 28
      %v978 = vpop.permute.xlu0 %977
      %979 = vrot.lane.b32.xlu0 %v912, 28
      %v980 = vpop.permute.xlu0 %979
      %981 = vrot.lane.b32.xlu0 %v916, 28
      %v982 = vpop.permute.xlu0 %981
      %983 = vrot.lane.b32.xlu0 %v920, 28
      %v984 = vpop.permute.xlu0 %983
      %985 = vrot.lane.b32.xlu0 %v924, 28
      %v986 = vpop.permute.xlu0 %985
      %987 = vrot.lane.b32.xlu0 %v928, 28
      %v988 = vpop.permute.xlu0 %987
      %989 = vrot.lane.b32.xlu0 %v932, 28
      %v990 = vpop.permute.xlu0 %989
      %991 = vrot.lane.b32.xlu0 %v936, 28
      %v992 = vpop.permute.xlu0 %991
      %993 = vrot.lane.b32.xlu0 %v940, 28
      %v994 = vpop.permute.xlu0 %993
      %995 = vrot.lane.b32.xlu0 %v944, 28
      %v996 = vpop.permute.xlu0 %995
      %997 = vrot.lane.b32.xlu0 %v948, 28
      %v998 = vpop.permute.xlu0 %997
      %999 = vrot.lane.b32.xlu0 %v957, 28
      %v1000 = vpop.permute.xlu0 %999
      %1001 = vrot.lane.b32.xlu0 %v966, 28
      %v1002 = vpop.permute.xlu0 %1001
      %vm1003 = vcmask 1044480
      %v1004 = vrot.slane %v315, 3
      %v1005 = vrot.slane %v316, 3
      %v1006 = vsel %vm1003, %v1004, %v1005
      %v1007 = vrot.slane %v317, 3
      %v1008 = vsel %vm1003, %v1005, %v1007
      %v1009 = vrot.slane %v318, 3
      %v1010 = vsel %vm1003, %v1007, %v1009
      %v1011 = vrot.slane %v319, 3
      %v1012 = vsel %vm1003, %v1009, %v1011
      %v1013 = vrot.slane %v320, 3
      %v1014 = vsel %vm1003, %v1011, %v1013
      %v1015 = vrot.slane %v321, 3
      %v1016 = vsel %vm1003, %v1013, %v1015
      %v1017 = vrot.slane %v322, 3
      %v1018 = vsel %vm1003, %v1015, %v1017
      %v1019 = vrot.slane %v323, 3
      %v1020 = vsel %vm1003, %v1017, %v1019
      %v1021 = vrot.slane %v324, 3
      %v1022 = vsel %vm1003, %v1019, %v1021
      %v1023 = vrot.slane %v325, 3
      %v1024 = vsel %vm1003, %v1021, %v1023
      %v1025 = vrot.slane %v326, 3
      %v1026 = vsel %vm1003, %v1023, %v1025
      %v1027 = vrot.slane %v327, 3
      %v1028 = vsel %vm1003, %v1025, %v1027
      %v1029 = vrot.slane %v328, 3
      %v1030 = vsel %vm1003, %v1027, %v1029
      %v1031 = vrot.slane %v329, 3
      %v1032 = vsel %vm1003, %v1029, %v1031
      %v1033 = vrot.slane %v330, 3
      %v1034 = vsel %vm1003, %v1031, %v1033
      %v1035 = vrot.slane %v597, 3
      %v1036 = vsel %vm1003, %v1033, %v1035
      %v1037 = vrot.slane %v839, 3
      %v1038 = vsel %vm1003, %v1035, %v1037
      %v1039 = vrot.slane %v840, 3
      %v1040 = vsel %vm1003, %v1037, %v1039
      %1041 = vrot.lane.b32.xlu0 %v1006, 32
      %v1042 = vpop.permute.xlu0 %1041
      %1043 = vrot.lane.b32.xlu0 %v1008, 32
      %v1044 = vpop.permute.xlu0 %1043
      %1045 = vrot.lane.b32.xlu0 %v1010, 32
      %v1046 = vpop.permute.xlu0 %1045
      %1047 = vrot.lane.b32.xlu0 %v1012, 32
      %v1048 = vpop.permute.xlu0 %1047
      %1049 = vrot.lane.b32.xlu0 %v1014, 32
      %v1050 = vpop.permute.xlu0 %1049
      %1051 = vrot.lane.b32.xlu0 %v1016, 32
      %v1052 = vpop.permute.xlu0 %1051
      %1053 = vrot.lane.b32.xlu0 %v1018, 32
      %v1054 = vpop.permute.xlu0 %1053
      %1055 = vrot.lane.b32.xlu0 %v1020, 32
      %v1056 = vpop.permute.xlu0 %1055
      %1057 = vrot.lane.b32.xlu0 %v1022, 32
      %v1058 = vpop.permute.xlu0 %1057
      %1059 = vrot.lane.b32.xlu0 %v1024, 32
      %v1060 = vpop.permute.xlu0 %1059
      %1061 = vrot.lane.b32.xlu0 %v1026, 32
      %v1062 = vpop.permute.xlu0 %1061
      %1063 = vrot.lane.b32.xlu0 %v1028, 32
      %v1064 = vpop.permute.xlu0 %1063
      %1065 = vrot.lane.b32.xlu0 %v1030, 32
      %v1066 = vpop.permute.xlu0 %1065
      %1067 = vrot.lane.b32.xlu0 %v1032, 32
      %v1068 = vpop.permute.xlu0 %1067
      %1069 = vrot.lane.b32.xlu0 %v1034, 32
      %v1070 = vpop.permute.xlu0 %1069
      %1071 = vrot.lane.b32.xlu0 %v1036, 32
      %v1072 = vpop.permute.xlu0 %1071
      %1073 = vrot.lane.b32.xlu0 %v1038, 32
      %v1074 = vpop.permute.xlu0 %1073
      %1075 = vrot.lane.b32.xlu0 %v1040, 32
      %v1076 = vpop.permute.xlu0 %1075
      %vm1077 = vcmask 31744
      %v1079 = vsel %vm1077, %v313, %v484
      %v1081 = vsel %vm1077, %v314, %v486
      %v1083 = vsel %vm1077, %v315, %v488
      %v1085 = vsel %vm1077, %v316, %v490
      %v1087 = vsel %vm1077, %v317, %v492
      %v1089 = vsel %vm1077, %v318, %v494
      %v1091 = vsel %vm1077, %v319, %v496
      %v1093 = vsel %vm1077, %v320, %v498
      %v1095 = vsel %vm1077, %v321, %v500
      %v1097 = vsel %vm1077, %v322, %v502
      %v1099 = vsel %vm1077, %v323, %v504
      %v1101 = vsel %vm1077, %v324, %v506
      %v1103 = vsel %vm1077, %v325, %v508
      %v1105 = vsel %vm1077, %v326, %v510
      %v1107 = vsel %vm1077, %v327, %v512
      %v1109 = vsel %vm1077, %v328, %v514
      %v1111 = vsel %vm1077, %v329, %v516
      %v1113 = vsel %vm1077, %v330, %v518
      %vm1114 = vcmask 64512
      %v1116 = vsel %vm1114, %v1079, %v558
      %v1118 = vsel %vm1114, %v1081, %v560
      %v1120 = vsel %vm1114, %v1083, %v562
      %v1122 = vsel %vm1114, %v1085, %v564
      %v1124 = vsel %vm1114, %v1087, %v566
      %v1126 = vsel %vm1114, %v1089, %v568
      %v1128 = vsel %vm1114, %v1091, %v570
      %v1130 = vsel %vm1114, %v1093, %v572
      %v1132 = vsel %vm1114, %v1095, %v574
      %v1134 = vsel %vm1114, %v1097, %v576
      %v1136 = vsel %vm1114, %v1099, %v578
      %v1138 = vsel %vm1114, %v1101, %v580
      %v1140 = vsel %vm1114, %v1103, %v582
      %v1142 = vsel %vm1114, %v1105, %v584
      %v1144 = vsel %vm1114, %v1107, %v586
      %v1146 = vsel %vm1114, %v1109, %v588
      %v1148 = vsel %vm1114, %v1111, %v590
      %v1150 = vsel %vm1114, %v1113, %v592
      %vm1151 = vcmask 97280
      %v1153 = vsel %vm1151, %v1116, %v604
      %v1155 = vsel %vm1151, %v1118, %v606
      %v1157 = vsel %vm1151, %v1120, %v608
      %v1159 = vsel %vm1151, %v1122, %v610
      %v1161 = vsel %vm1151, %v1124, %v612
      %v1163 = vsel %vm1151, %v1126, %v614
      %v1165 = vsel %vm1151, %v1128, %v616
      %v1167 = vsel %vm1151, %v1130, %v618
      %v1169 = vsel %vm1151, %v1132, %v620
      %v1171 = vsel %vm1151, %v1134, %v622
      %v1173 = vsel %vm1151, %v1136, %v624
      %v1175 = vsel %vm1151, %v1138, %v626
      %v1177 = vsel %vm1151, %v1140, %v628
      %v1179 = vsel %vm1151, %v1142, %v630
      %v1181 = vsel %vm1151, %v1144, %v632
      %v1183 = vsel %vm1151, %v1146, %v634
      %v1185 = vsel %vm1151, %v1148, %v636
      %v1187 = vsel %vm1151, %v1150, %v638
      %vm1188 = vcmask 130048
      %v1190 = vsel %vm1188, %v1153, %v726
      %v1192 = vsel %vm1188, %v1155, %v728
      %v1194 = vsel %vm1188, %v1157, %v730
      %v1196 = vsel %vm1188, %v1159, %v732
      %v1198 = vsel %vm1188, %v1161, %v734
      %v1200 = vsel %vm1188, %v1163, %v736
      %v1202 = vsel %vm1188, %v1165, %v738
      %v1204 = vsel %vm1188, %v1167, %v740
      %v1206 = vsel %vm1188, %v1169, %v742
      %v1208 = vsel %vm1188, %v1171, %v744
      %v1210 = vsel %vm1188, %v1173, %v746
      %v1212 = vsel %vm1188, %v1175, %v748
      %v1214 = vsel %vm1188, %v1177, %v750
      %v1216 = vsel %vm1188, %v1179, %v752
      %v1218 = vsel %vm1188, %v1181, %v754
      %v1220 = vsel %vm1188, %v1183, %v756
      %v1222 = vsel %vm1188, %v1185, %v758
      %v1224 = vsel %vm1188, %v1187, %v760
      %vm1225 = vcmask 162816
      %v1227 = vsel %vm1225, %v1190, %v800
      %v1229 = vsel %vm1225, %v1192, %v802
      %v1231 = vsel %vm1225, %v1194, %v804
      %v1233 = vsel %vm1225, %v1196, %v806
      %v1235 = vsel %vm1225, %v1198, %v808
      %v1237 = vsel %vm1225, %v1200, %v810
      %v1239 = vsel %vm1225, %v1202, %v812
      %v1241 = vsel %vm1225, %v1204, %v814
      %v1243 = vsel %vm1225, %v1206, %v816
      %v1245 = vsel %vm1225, %v1208, %v818
      %v1247 = vsel %vm1225, %v1210, %v820
      %v1249 = vsel %vm1225, %v1212, %v822
      %v1251 = vsel %vm1225, %v1214, %v824
      %v1253 = vsel %vm1225, %v1216, %v826
      %v1255 = vsel %vm1225, %v1218, %v828
      %v1257 = vsel %vm1225, %v1220, %v830
      %v1259 = vsel %vm1225, %v1222, %v832
      %v1261 = vsel %vm1225, %v1224, %v834
      %vm1262 = vcmask 195584
      %v1264 = vsel %vm1262, %v1227, %v846
      %v1266 = vsel %vm1262, %v1229, %v848
      %v1268 = vsel %vm1262, %v1231, %v850
      %v1270 = vsel %vm1262, %v1233, %v852
      %v1272 = vsel %vm1262, %v1235, %v854
      %v1274 = vsel %vm1262, %v1237, %v856
      %v1276 = vsel %vm1262, %v1239, %v858
      %v1278 = vsel %vm1262, %v1241, %v860
      %v1280 = vsel %vm1262, %v1243, %v862
      %v1282 = vsel %vm1262, %v1245, %v864
      %v1284 = vsel %vm1262, %v1247, %v866
      %v1286 = vsel %vm1262, %v1249, %v868
      %v1288 = vsel %vm1262, %v1251, %v870
      %v1290 = vsel %vm1262, %v1253, %v872
      %v1292 = vsel %vm1262, %v1255, %v874
      %v1294 = vsel %vm1262, %v1257, %v876
      %v1296 = vsel %vm1262, %v1259, %v878
      %v1298 = vsel %vm1262, %v1261, %v880
      %vm1299 = vcmask 228352
      %v1301 = vsel %vm1299, %v1264, %v968
      %v1303 = vsel %vm1299, %v1266, %v970
      %v1305 = vsel %vm1299, %v1268, %v972
      %v1307 = vsel %vm1299, %v1270, %v974
      %v1309 = vsel %vm1299, %v1272, %v976
      %v1311 = vsel %vm1299, %v1274, %v978
      %v1313 = vsel %vm1299, %v1276, %v980
      %v1315 = vsel %vm1299, %v1278, %v982
      %v1317 = vsel %vm1299, %v1280, %v984
      %v1319 = vsel %vm1299, %v1282, %v986
      %v1321 = vsel %vm1299, %v1284, %v988
      %v1323 = vsel %vm1299, %v1286, %v990
      %v1325 = vsel %vm1299, %v1288, %v992
      %v1327 = vsel %vm1299, %v1290, %v994
      %v1329 = vsel %vm1299, %v1292, %v996
      %v1331 = vsel %vm1299, %v1294, %v998
      %v1333 = vsel %vm1299, %v1296, %v1000
      %v1335 = vsel %vm1299, %v1298, %v1002
      %vm1336 = vcmask 261120
      %v1338 = vsel %vm1336, %v1301, %v1042
      %v1340 = vsel %vm1336, %v1303, %v1044
      %v1342 = vsel %vm1336, %v1305, %v1046
      %v1344 = vsel %vm1336, %v1307, %v1048
      %v1346 = vsel %vm1336, %v1309, %v1050
      %v1348 = vsel %vm1336, %v1311, %v1052
      %v1350 = vsel %vm1336, %v1313, %v1054
      %v1352 = vsel %vm1336, %v1315, %v1056
      %v1354 = vsel %vm1336, %v1317, %v1058
      %v1356 = vsel %vm1336, %v1319, %v1060
      %v1358 = vsel %vm1336, %v1321, %v1062
      %v1360 = vsel %vm1336, %v1323, %v1064
      %v1362 = vsel %vm1336, %v1325, %v1066
      %v1364 = vsel %vm1336, %v1327, %v1068
      %v1366 = vsel %vm1336, %v1329, %v1070
      %v1368 = vsel %vm1336, %v1331, %v1072
      %v1370 = vsel %vm1336, %v1333, %v1074
      %v1372 = vsel %vm1336, %v1335, %v1076
      %v1373 = vld [vmem:[%s1] sm:$0xf]
      %v1374 = vld [vmem:[%s1 + $0x4] sm:$0xf]
      %v1375 = vld [vmem:[%s1 + $0x8] sm:$0xf]
      %v1376 = vld [vmem:[%s1 + $0xc] sm:$0xf]
      %v1377 = vld [vmem:[%s1 + $0x10] sm:$0x3]
      %v1378 = vld [vmem:[%s2] sm:$0x1]
      %v1380 = vlaneseq
      %v1381 = vshrl.u32 %v1380, 7
      %v1382 = vsub.s32 0, %v1381
      %v1383 = vrot.slane %v1378, %v1382
      %v1390 = vunpack.c.l.b16 %v1373
      %v1391 = vunpack.c.l.b16 %v1374
      %v1392 = vunpack.c.l.b16 %v1375
      %v1393 = vunpack.c.l.b16 %v1376
      %v1394 = vunpack.c.l.b16 %v1377
      %v1395 = vpack.c.b16 %v1391, %v1390
      %v1396 = vpack.c.b16 %v1393, %v1392
      %v1397 = vpack.c.b16 %v1394, %v1394
      %vm1400 = vcmask 293888
      %v1401 = vsel %vm1400, %v1338, 0
      %v1403 = vsel %vm1400, %v1340, 0
      %v1405 = vsel %vm1400, %v1342, 0
      %v1407 = vsel %vm1400, %v1344, 0
      %v1409 = vsel %vm1400, %v1346, 0
      %v1411 = vsel %vm1400, %v1348, 0
      %v1413 = vsel %vm1400, %v1350, 0
      %v1415 = vsel %vm1400, %v1352, 0
      %v1417 = vsel %vm1400, %v1354, 0
      %v1419 = vsel %vm1400, %v1356, 0
      %v1421 = vsel %vm1400, %v1358, 0
      %v1423 = vsel %vm1400, %v1360, 0
      %v1425 = vsel %vm1400, %v1362, 0
      %v1427 = vsel %vm1400, %v1364, 0
      %v1429 = vsel %vm1400, %v1366, 0
      %v1431 = vsel %vm1400, %v1368, 0
      %v1433 = vsel %vm1400, %v1370, 0
      %v1435 = vsel %vm1400, %v1372, 0
      %vm1437 = vcmask 1041408
      %v1439 = vsel %vm1437, %v1397, 0
      %1441 = vmatprep.subr.bf16.mxu0 0
      %1442 = vmatpush1.bf16.msra.mxu0 0
      %1443 = vmatprep.subr.bf16.mxu0 0
      %1444 = vmatpush1.bf16.msra.mxu0 0
      %1445 = vmatprep.subr.bf16.mxu0 0
      %1446 = vmatpush1.bf16.msra.mxu0 0
      %1447 = vmatprep.subr.bf16.mxu0 0
      %1448 = vmatpush1.bf16.msra.mxu0 0
      %1449 = vmatprep.subr.bf16.mxu0 0
      %1450 = vmatpush1.bf16.msra.mxu0 0
      %1451 = vmatprep.subr.bf16.mxu0 0
      %1452 = vmatpush1.bf16.msra.mxu0 %v1439
      %1453 = vmatprep.subr.bf16.mxu0 0
      %1454 = vmatpush1.bf16.msra.mxu0 %v1396
      %1455 = vmatprep.subr.bf16.mxu0 0
      %1456 = vmatpush1.bf16.msra.mxu0 %v1395
      %1457 = vmatprep.subr.bf16.mxu0 0
      %1458 = vmatpush2.bf16.msra.mxu0 0
      %1459 = vmatprep.subr.bf16.mxu0 0
      %1460 = vmatpush2.bf16.msra.mxu0 0
      %1461 = vmatprep.subr.bf16.mxu0 0
      %1462 = vmatpush2.bf16.msra.mxu0 0
      %1463 = vmatprep.subr.bf16.mxu0 0
      %1464 = vmatpush2.bf16.msra.mxu0 0
      %1465 = vmatprep.subr.bf16.mxu0 0
      %1466 = vmatpush2.bf16.msra.mxu0 0
      %1467 = vmatprep.subr.bf16.mxu0 0
      %1468 = vmatpush2.bf16.msra.mxu0 0
      %1469 = vmatprep.subr.bf16.mxu0 0
      %1470 = vmatpush2.bf16.msra.mxu0 0
      %1471 = vmatprep.subr.bf16.mxu0 0
      %1472 = vmatpush2.bf16.msra.mxu0 0
      %1473 = vmatprep.mubr.bf16.mxu0 0
      %1474 = vmatmul.mubr.bf16.gmra.mxu0 %v1401
      %v1475 = vpop.f32.mrf.mxu0
      %v1476 = vadd.f32 %v1383, %v1475
      %v1477 = vpop.f32.mrf.mxu0
      %v1478 = vpop.f32.mrf.mxu0
      %v1479 = vadd.f32 %v1383, %v1478
      %v1480 = vpop.f32.mrf.mxu0
      %1481 = vmatprep.mubr.bf16.mxu0 0
      %1482 = vmatmul.mubr.bf16.gmra.mxu0 %v1403
      %v1483 = vpop.f32.mrf.mxu0
      %v1484 = vadd.f32 %v1383, %v1483
      %v1485 = vpop.f32.mrf.mxu0
      %v1486 = vpop.f32.mrf.mxu0
      %v1487 = vadd.f32 %v1383, %v1486
      %v1488 = vpop.f32.mrf.mxu0
      %1489 = vmatprep.mubr.bf16.mxu0 0
      %1490 = vmatmul.mubr.bf16.gmra.mxu0 %v1405
      %v1491 = vpop.f32.mrf.mxu0
      %v1492 = vadd.f32 %v1383, %v1491
      %v1493 = vpop.f32.mrf.mxu0
      %v1494 = vpop.f32.mrf.mxu0
      %v1495 = vadd.f32 %v1383, %v1494
      %v1496 = vpop.f32.mrf.mxu0
      %1497 = vmatprep.mubr.bf16.mxu0 0
      %1498 = vmatmul.mubr.bf16.gmra.mxu0 %v1407
      %v1499 = vpop.f32.mrf.mxu0
      %v1500 = vadd.f32 %v1383, %v1499
      %v1501 = vpop.f32.mrf.mxu0
      %v1502 = vpop.f32.mrf.mxu0
      %v1503 = vadd.f32 %v1383, %v1502
      %v1504 = vpop.f32.mrf.mxu0
      %1505 = vmatprep.mubr.bf16.mxu0 0
      %1506 = vmatmul.mubr.bf16.gmra.mxu0 %v1409
      %v1507 = vpop.f32.mrf.mxu0
      %v1508 = vadd.f32 %v1383, %v1507
      %v1509 = vpop.f32.mrf.mxu0
      %v1510 = vpop.f32.mrf.mxu0
      %v1511 = vadd.f32 %v1383, %v1510
      %v1512 = vpop.f32.mrf.mxu0
      %1513 = vmatprep.mubr.bf16.mxu0 0
      %1514 = vmatmul.mubr.bf16.gmra.mxu0 %v1411
      %v1515 = vpop.f32.mrf.mxu0
      %v1516 = vadd.f32 %v1383, %v1515
      %v1517 = vpop.f32.mrf.mxu0
      %v1518 = vpop.f32.mrf.mxu0
      %v1519 = vadd.f32 %v1383, %v1518
      %v1520 = vpop.f32.mrf.mxu0
      %1521 = vmatprep.mubr.bf16.mxu0 0
      %1522 = vmatmul.mubr.bf16.gmra.mxu0 %v1413
      %v1523 = vpop.f32.mrf.mxu0
      %v1524 = vadd.f32 %v1383, %v1523
      %v1525 = vpop.f32.mrf.mxu0
      %v1526 = vpop.f32.mrf.mxu0
      %v1527 = vadd.f32 %v1383, %v1526
      %v1528 = vpop.f32.mrf.mxu0
      %1529 = vmatprep.mubr.bf16.mxu0 0
      %1530 = vmatmul.mubr.bf16.gmra.mxu0 %v1415
      %v1531 = vpop.f32.mrf.mxu0
      %v1532 = vadd.f32 %v1383, %v1531
      %v1533 = vpop.f32.mrf.mxu0
      %v1534 = vpop.f32.mrf.mxu0
      %v1535 = vadd.f32 %v1383, %v1534
      %v1536 = vpop.f32.mrf.mxu0
      %1537 = vmatprep.mubr.bf16.mxu0 0
      %1538 = vmatmul.mubr.bf16.gmra.mxu0 %v1417
      %v1539 = vpop.f32.mrf.mxu0
      %v1540 = vadd.f32 %v1383, %v1539
      %v1541 = vpop.f32.mrf.mxu0
      %v1542 = vpop.f32.mrf.mxu0
      %v1543 = vadd.f32 %v1383, %v1542
      %v1544 = vpop.f32.mrf.mxu0
      %1545 = vmatprep.mubr.bf16.mxu0 0
      %1546 = vmatmul.mubr.bf16.gmra.mxu0 %v1419
      %v1547 = vpop.f32.mrf.mxu0
      %v1548 = vadd.f32 %v1383, %v1547
      %v1549 = vpop.f32.mrf.mxu0
      %v1550 = vpop.f32.mrf.mxu0
      %v1551 = vadd.f32 %v1383, %v1550
      %v1552 = vpop.f32.mrf.mxu0
      %1553 = vmatprep.mubr.bf16.mxu0 0
      %1554 = vmatmul.mubr.bf16.gmra.mxu0 %v1421
      %v1555 = vpop.f32.mrf.mxu0
      %v1556 = vadd.f32 %v1383, %v1555
      %v1557 = vpop.f32.mrf.mxu0
      %v1558 = vpop.f32.mrf.mxu0
      %v1559 = vadd.f32 %v1383, %v1558
      %v1560 = vpop.f32.mrf.mxu0
      %1561 = vmatprep.mubr.bf16.mxu0 0
      %1562 = vmatmul.mubr.bf16.gmra.mxu0 %v1423
      %v1563 = vpop.f32.mrf.mxu0
      %v1564 = vadd.f32 %v1383, %v1563
      %v1565 = vpop.f32.mrf.mxu0
      %v1566 = vpop.f32.mrf.mxu0
      %v1567 = vadd.f32 %v1383, %v1566
      %v1568 = vpop.f32.mrf.mxu0
      %1569 = vmatprep.mubr.bf16.mxu0 0
      %1570 = vmatmul.mubr.bf16.gmra.mxu0 %v1425
      %v1571 = vpop.f32.mrf.mxu0
      %v1572 = vadd.f32 %v1383, %v1571
      %v1573 = vpop.f32.mrf.mxu0
      %v1574 = vpop.f32.mrf.mxu0
      %v1575 = vadd.f32 %v1383, %v1574
      %v1576 = vpop.f32.mrf.mxu0
      %1577 = vmatprep.mubr.bf16.mxu0 0
      %1578 = vmatmul.mubr.bf16.gmra.mxu0 %v1427
      %v1579 = vpop.f32.mrf.mxu0
      %v1580 = vadd.f32 %v1383, %v1579
      %v1581 = vpop.f32.mrf.mxu0
      %v1582 = vpop.f32.mrf.mxu0
      %v1583 = vadd.f32 %v1383, %v1582
      %v1584 = vpop.f32.mrf.mxu0
      %1585 = vmatprep.mubr.bf16.mxu0 0
      %1586 = vmatmul.mubr.bf16.gmra.mxu0 %v1429
      %v1587 = vpop.f32.mrf.mxu0
      %v1588 = vadd.f32 %v1383, %v1587
      %v1589 = vpop.f32.mrf.mxu0
      %v1590 = vpop.f32.mrf.mxu0
      %v1591 = vadd.f32 %v1383, %v1590
      %v1592 = vpop.f32.mrf.mxu0
      %1593 = vmatprep.mubr.bf16.mxu0 0
      %1594 = vmatmul.mubr.bf16.gmra.mxu0 %v1431
      %v1595 = vpop.f32.mrf.mxu0
      %v1596 = vadd.f32 %v1383, %v1595
      %v1597 = vpop.f32.mrf.mxu0
      %v1598 = vpop.f32.mrf.mxu0
      %v1599 = vadd.f32 %v1383, %v1598
      %v1600 = vpop.f32.mrf.mxu0
      %1601 = vmatprep.mubr.bf16.mxu0 0
      %1602 = vmatmul.mubr.bf16.gmra.mxu0 %v1433
      %v1603 = vpop.f32.mrf.mxu0
      %v1604 = vadd.f32 %v1383, %v1603
      %v1605 = vpop.f32.mrf.mxu0
      %v1606 = vpop.f32.mrf.mxu0
      %v1607 = vadd.f32 %v1383, %v1606
      %v1608 = vpop.f32.mrf.mxu0
      %1609 = vmatprep.mubr.bf16.mxu0 0
      %1610 = vmatmul.mubr.bf16.gmra.mxu0 %v1435
      %v1611 = vpop.f32.mrf.mxu0
      %v1612 = vadd.f32 %v1383, %v1611
      %v1613 = vpop.f32.mrf.mxu0
      %v1614 = vpop.f32.mrf.mxu0
      %v1615 = vadd.f32 %v1383, %v1614
      %v1616 = vpop.f32.mrf.mxu0
      %1617 = vdwg.mxu0
      %vm1618 = vcmp.gt.f32.partialorder %v1476, 0.0
      %vm1619 = vcmp.gt.f32.partialorder %v1479, 0.0
      %vm1620 = vcmp.gt.f32.partialorder %v1484, 0.0
      %vm1621 = vcmp.gt.f32.partialorder %v1487, 0.0
      %vm1622 = vcmp.gt.f32.partialorder %v1492, 0.0
      %vm1623 = vcmp.gt.f32.partialorder %v1495, 0.0
      %vm1624 = vcmp.gt.f32.partialorder %v1500, 0.0
      %vm1625 = vcmp.gt.f32.partialorder %v1503, 0.0
      %vm1626 = vcmp.gt.f32.partialorder %v1508, 0.0
      %vm1627 = vcmp.gt.f32.partialorder %v1511, 0.0
      %vm1628 = vcmp.gt.f32.partialorder %v1516, 0.0
      %vm1629 = vcmp.gt.f32.partialorder %v1519, 0.0
      %vm1630 = vcmp.gt.f32.partialorder %v1524, 0.0
      %vm1631 = vcmp.gt.f32.partialorder %v1527, 0.0
      %vm1632 = vcmp.gt.f32.partialorder %v1532, 0.0
      %vm1633 = vcmp.gt.f32.partialorder %v1535, 0.0
      %vm1634 = vcmp.gt.f32.partialorder %v1540, 0.0
      %vm1635 = vcmp.gt.f32.partialorder %v1543, 0.0
      %vm1636 = vcmp.gt.f32.partialorder %v1548, 0.0
      %vm1637 = vcmp.gt.f32.partialorder %v1551, 0.0
      %vm1638 = vcmp.gt.f32.partialorder %v1556, 0.0
      %vm1639 = vcmp.gt.f32.partialorder %v1559, 0.0
      %vm1640 = vcmp.gt.f32.partialorder %v1564, 0.0
      %vm1641 = vcmp.gt.f32.partialorder %v1567, 0.0
      %vm1642 = vcmp.gt.f32.partialorder %v1572, 0.0
      %vm1643 = vcmp.gt.f32.partialorder %v1575, 0.0
      %vm1644 = vcmp.gt.f32.partialorder %v1580, 0.0
      %vm1645 = vcmp.gt.f32.partialorder %v1583, 0.0
      %vm1646 = vcmp.gt.f32.partialorder %v1588, 0.0
      %vm1647 = vcmp.gt.f32.partialorder %v1591, 0.0
      %vm1648 = vcmp.gt.f32.partialorder %v1596, 0.0
      %vm1649 = vcmp.gt.f32.partialorder %v1599, 0.0
      %vm1650 = vcmp.gt.f32.partialorder %v1604, 0.0
      %vm1651 = vcmp.gt.f32.partialorder %v1607, 0.0
      %vm1652 = vcmp.gt.f32.partialorder %v1612, 0.0
      %vm1653 = vcmp.gt.f32.partialorder %v1615, 0.0
      %v1654 = vmul.f32 %v1476, 0.1
      %v1655 = vmul.f32 %v1479, 0.1
      %v1656 = vmul.f32 %v1484, 0.1
      %v1657 = vmul.f32 %v1487, 0.1
      %v1658 = vmul.f32 %v1492, 0.1
      %v1659 = vmul.f32 %v1495, 0.1
      %v1660 = vmul.f32 %v1500, 0.1
      %v1661 = vmul.f32 %v1503, 0.1
      %v1662 = vmul.f32 %v1508, 0.1
      %v1663 = vmul.f32 %v1511, 0.1
      %v1664 = vmul.f32 %v1516, 0.1
      %v1665 = vmul.f32 %v1519, 0.1
      %v1666 = vmul.f32 %v1524, 0.1
      %v1667 = vmul.f32 %v1527, 0.1
      %v1668 = vmul.f32 %v1532, 0.1
      %v1669 = vmul.f32 %v1535, 0.1
      %v1670 = vmul.f32 %v1540, 0.1
      %v1671 = vmul.f32 %v1543, 0.1
      %v1672 = vmul.f32 %v1548, 0.1
      %v1673 = vmul.f32 %v1551, 0.1
      %v1674 = vmul.f32 %v1556, 0.1
      %v1675 = vmul.f32 %v1559, 0.1
      %v1676 = vmul.f32 %v1564, 0.1
      %v1677 = vmul.f32 %v1567, 0.1
      %v1678 = vmul.f32 %v1572, 0.1
      %v1679 = vmul.f32 %v1575, 0.1
      %v1680 = vmul.f32 %v1580, 0.1
      %v1681 = vmul.f32 %v1583, 0.1
      %v1682 = vmul.f32 %v1588, 0.1
      %v1683 = vmul.f32 %v1591, 0.1
      %v1684 = vmul.f32 %v1596, 0.1
      %v1685 = vmul.f32 %v1599, 0.1
      %v1686 = vmul.f32 %v1604, 0.1
      %v1687 = vmul.f32 %v1607, 0.1
      %v1688 = vmul.f32 %v1612, 0.1
      %v1689 = vmul.f32 %v1615, 0.1
      %v1690 = vsel %vm1618, %v1476, %v1654
      %v1691 = vsel %vm1619, %v1479, %v1655
      %v1692 = vsel %vm1620, %v1484, %v1656
      %v1693 = vsel %vm1621, %v1487, %v1657
      %v1694 = vsel %vm1622, %v1492, %v1658
      %v1695 = vsel %vm1623, %v1495, %v1659
      %v1696 = vsel %vm1624, %v1500, %v1660
      %v1697 = vsel %vm1625, %v1503, %v1661
      %v1698 = vsel %vm1626, %v1508, %v1662
      %v1699 = vsel %vm1627, %v1511, %v1663
      %v1700 = vsel %vm1628, %v1516, %v1664
      %v1701 = vsel %vm1629, %v1519, %v1665
      %v1702 = vsel %vm1630, %v1524, %v1666
      %v1703 = vsel %vm1631, %v1527, %v1667
      %v1704 = vsel %vm1632, %v1532, %v1668
      %v1705 = vsel %vm1633, %v1535, %v1669
      %v1706 = vsel %vm1634, %v1540, %v1670
      %v1707 = vsel %vm1635, %v1543, %v1671
      %v1708 = vsel %vm1636, %v1548, %v1672
      %v1709 = vsel %vm1637, %v1551, %v1673
      %v1710 = vsel %vm1638, %v1556, %v1674
      %v1711 = vsel %vm1639, %v1559, %v1675
      %v1712 = vsel %vm1640, %v1564, %v1676
      %v1713 = vsel %vm1641, %v1567, %v1677
      %v1714 = vsel %vm1642, %v1572, %v1678
      %v1715 = vsel %vm1643, %v1575, %v1679
      %v1716 = vsel %vm1644, %v1580, %v1680
      %v1717 = vsel %vm1645, %v1583, %v1681
      %v1718 = vsel %vm1646, %v1588, %v1682
      %v1719 = vsel %vm1647, %v1591, %v1683
      %v1720 = vsel %vm1648, %v1596, %v1684
      %v1721 = vsel %vm1649, %v1599, %v1685
      %v1722 = vsel %vm1650, %v1604, %v1686
      %v1723 = vsel %vm1651, %v1607, %v1687
      %v1724 = vsel %vm1652, %v1612, %v1688
      %v1725 = vsel %vm1653, %v1615, %v1689
      %v1726 = vpack.c.bf16 %v1691, %v1690
      %v1727 = vpack.c.bf16 %v1693, %v1692
      %v1728 = vpack.c.bf16 %v1695, %v1694
      %v1729 = vpack.c.bf16 %v1697, %v1696
      %v1730 = vpack.c.bf16 %v1699, %v1698
      %v1731 = vpack.c.bf16 %v1701, %v1700
      %v1732 = vpack.c.bf16 %v1703, %v1702
      %v1733 = vpack.c.bf16 %v1705, %v1704
      %v1734 = vpack.c.bf16 %v1707, %v1706
      %v1735 = vpack.c.bf16 %v1709, %v1708
      %v1736 = vpack.c.bf16 %v1711, %v1710
      %v1737 = vpack.c.bf16 %v1713, %v1712
      %v1738 = vpack.c.bf16 %v1715, %v1714
      %v1739 = vpack.c.bf16 %v1717, %v1716
      %v1740 = vpack.c.bf16 %v1719, %v1718
      %v1741 = vpack.c.bf16 %v1721, %v1720
      %v1742 = vpack.c.bf16 %v1723, %v1722
      %v1743 = vpack.c.bf16 %v1725, %v1724
      %1762 = vrot.lane.b32.xlu0 %v1726, 8
      %v1763 = vpop.permute.xlu0 %1762
      %1764 = vrot.lane.b32.xlu0 %v1727, 8
      %v1765 = vpop.permute.xlu0 %1764
      %1766 = vrot.lane.b32.xlu0 %v1728, 8
      %v1767 = vpop.permute.xlu0 %1766
      %1768 = vrot.lane.b32.xlu0 %v1729, 8
      %v1769 = vpop.permute.xlu0 %1768
      %1770 = vrot.lane.b32.xlu0 %v1730, 8
      %v1771 = vpop.permute.xlu0 %1770
      %1772 = vrot.lane.b32.xlu0 %v1731, 8
      %v1773 = vpop.permute.xlu0 %1772
      %1774 = vrot.lane.b32.xlu0 %v1732, 8
      %v1775 = vpop.permute.xlu0 %1774
      %1776 = vrot.lane.b32.xlu0 %v1733, 8
      %v1777 = vpop.permute.xlu0 %1776
      %1778 = vrot.lane.b32.xlu0 %v1734, 8
      %v1779 = vpop.permute.xlu0 %1778
      %1780 = vrot.lane.b32.xlu0 %v1735, 8
      %v1781 = vpop.permute.xlu0 %1780
      %1782 = vrot.lane.b32.xlu0 %v1736, 8
      %v1783 = vpop.permute.xlu0 %1782
      %1784 = vrot.lane.b32.xlu0 %v1737, 8
      %v1785 = vpop.permute.xlu0 %1784
      %1786 = vrot.lane.b32.xlu0 %v1738, 8
      %v1787 = vpop.permute.xlu0 %1786
      %1788 = vrot.lane.b32.xlu0 %v1739, 8
      %v1789 = vpop.permute.xlu0 %1788
      %1790 = vrot.lane.b32.xlu0 %v1740, 8
      %v1791 = vpop.permute.xlu0 %1790
      %1792 = vrot.lane.b32.xlu0 %v1741, 8
      %v1793 = vpop.permute.xlu0 %1792
      %1794 = vrot.lane.b32.xlu0 %v1742, 8
      %v1795 = vpop.permute.xlu0 %1794
      %1796 = vrot.lane.b32.xlu0 %v1743, 8
      %v1797 = vpop.permute.xlu0 %1796
      %1798 = vrot.lane.b32.xlu0 %v1726, 16
      %v1799 = vpop.permute.xlu0 %1798
      %1800 = vrot.lane.b32.xlu0 %v1727, 16
      %v1801 = vpop.permute.xlu0 %1800
      %1802 = vrot.lane.b32.xlu0 %v1728, 16
      %v1803 = vpop.permute.xlu0 %1802
      %1804 = vrot.lane.b32.xlu0 %v1729, 16
      %v1805 = vpop.permute.xlu0 %1804
      %1806 = vrot.lane.b32.xlu0 %v1730, 16
      %v1807 = vpop.permute.xlu0 %1806
      %1808 = vrot.lane.b32.xlu0 %v1731, 16
      %v1809 = vpop.permute.xlu0 %1808
      %1810 = vrot.lane.b32.xlu0 %v1732, 16
      %v1811 = vpop.permute.xlu0 %1810
      %1812 = vrot.lane.b32.xlu0 %v1733, 16
      %v1813 = vpop.permute.xlu0 %1812
      %1814 = vrot.lane.b32.xlu0 %v1734, 16
      %v1815 = vpop.permute.xlu0 %1814
      %1816 = vrot.lane.b32.xlu0 %v1735, 16
      %v1817 = vpop.permute.xlu0 %1816
      %1818 = vrot.lane.b32.xlu0 %v1736, 16
      %v1819 = vpop.permute.xlu0 %1818
      %1820 = vrot.lane.b32.xlu0 %v1737, 16
      %v1821 = vpop.permute.xlu0 %1820
      %1822 = vrot.lane.b32.xlu0 %v1738, 16
      %v1823 = vpop.permute.xlu0 %1822
      %1824 = vrot.lane.b32.xlu0 %v1739, 16
      %v1825 = vpop.permute.xlu0 %1824
      %1826 = vrot.lane.b32.xlu0 %v1740, 16
      %v1827 = vpop.permute.xlu0 %1826
      %1828 = vrot.lane.b32.xlu0 %v1741, 16
      %v1829 = vpop.permute.xlu0 %1828
      %1830 = vrot.lane.b32.xlu0 %v1742, 16
      %v1831 = vpop.permute.xlu0 %1830
      %1832 = vrot.lane.b32.xlu0 %v1743, 16
      %v1833 = vpop.permute.xlu0 %1832
      %1834 = vrot.lane.b32.xlu0 %v1726, 24
      %v1835 = vpop.permute.xlu0 %1834
      %1836 = vrot.lane.b32.xlu0 %v1727, 24
      %v1837 = vpop.permute.xlu0 %1836
      %1838 = vrot.lane.b32.xlu0 %v1728, 24
      %v1839 = vpop.permute.xlu0 %1838
      %1840 = vrot.lane.b32.xlu0 %v1729, 24
      %v1841 = vpop.permute.xlu0 %1840
      %1842 = vrot.lane.b32.xlu0 %v1730, 24
      %v1843 = vpop.permute.xlu0 %1842
      %1844 = vrot.lane.b32.xlu0 %v1731, 24
      %v1845 = vpop.permute.xlu0 %1844
      %1846 = vrot.lane.b32.xlu0 %v1732, 24
      %v1847 = vpop.permute.xlu0 %1846
      %1848 = vrot.lane.b32.xlu0 %v1733, 24
      %v1849 = vpop.permute.xlu0 %1848
      %1850 = vrot.lane.b32.xlu0 %v1734, 24
      %v1851 = vpop.permute.xlu0 %1850
      %1852 = vrot.lane.b32.xlu0 %v1735, 24
      %v1853 = vpop.permute.xlu0 %1852
      %1854 = vrot.lane.b32.xlu0 %v1736, 24
      %v1855 = vpop.permute.xlu0 %1854
      %1856 = vrot.lane.b32.xlu0 %v1737, 24
      %v1857 = vpop.permute.xlu0 %1856
      %1858 = vrot.lane.b32.xlu0 %v1738, 24
      %v1859 = vpop.permute.xlu0 %1858
      %1860 = vrot.lane.b32.xlu0 %v1739, 24
      %v1861 = vpop.permute.xlu0 %1860
      %1862 = vrot.lane.b32.xlu0 %v1740, 24
      %v1863 = vpop.permute.xlu0 %1862
      %1864 = vrot.lane.b32.xlu0 %v1741, 24
      %v1865 = vpop.permute.xlu0 %1864
      %1866 = vrot.lane.b32.xlu0 %v1742, 24
      %v1867 = vpop.permute.xlu0 %1866
      %1868 = vrot.lane.b32.xlu0 %v1743, 24
      %v1869 = vpop.permute.xlu0 %1868
      %v1872 = vsel %vm1114, %v1726, %v1763
      %v1875 = vsel %vm1114, %v1727, %v1765
      %v1878 = vsel %vm1114, %v1728, %v1767
      %v1881 = vsel %vm1114, %v1729, %v1769
      %v1884 = vsel %vm1114, %v1730, %v1771
      %v1887 = vsel %vm1114, %v1731, %v1773
      %v1890 = vsel %vm1114, %v1732, %v1775
      %v1893 = vsel %vm1114, %v1733, %v1777
      %v1896 = vsel %vm1114, %v1734, %v1779
      %v1899 = vsel %vm1114, %v1735, %v1781
      %v1902 = vsel %vm1114, %v1736, %v1783
      %v1905 = vsel %vm1114, %v1737, %v1785
      %v1908 = vsel %vm1114, %v1738, %v1787
      %v1911 = vsel %vm1114, %v1739, %v1789
      %v1914 = vsel %vm1114, %v1740, %v1791
      %v1917 = vsel %vm1114, %v1741, %v1793
      %v1920 = vsel %vm1114, %v1742, %v1795
      %v1923 = vsel %vm1114, %v1743, %v1797
      %v1925 = vsel %vm1188, %v1872, %v1799
      %v1927 = vsel %vm1188, %v1875, %v1801
      %v1929 = vsel %vm1188, %v1878, %v1803
      %v1931 = vsel %vm1188, %v1881, %v1805
      %v1933 = vsel %vm1188, %v1884, %v1807
      %v1935 = vsel %vm1188, %v1887, %v1809
      %v1937 = vsel %vm1188, %v1890, %v1811
      %v1939 = vsel %vm1188, %v1893, %v1813
      %v1941 = vsel %vm1188, %v1896, %v1815
      %v1943 = vsel %vm1188, %v1899, %v1817
      %v1945 = vsel %vm1188, %v1902, %v1819
      %v1947 = vsel %vm1188, %v1905, %v1821
      %v1949 = vsel %vm1188, %v1908, %v1823
      %v1951 = vsel %vm1188, %v1911, %v1825
      %v1953 = vsel %vm1188, %v1914, %v1827
      %v1955 = vsel %vm1188, %v1917, %v1829
      %v1957 = vsel %vm1188, %v1920, %v1831
      %v1959 = vsel %vm1188, %v1923, %v1833
      %v1961 = vsel %vm1262, %v1925, %v1835
      %v1963 = vsel %vm1262, %v1927, %v1837
      %v1965 = vsel %vm1262, %v1929, %v1839
      %v1967 = vsel %vm1262, %v1931, %v1841
      %v1969 = vsel %vm1262, %v1933, %v1843
      %v1971 = vsel %vm1262, %v1935, %v1845
      %v1973 = vsel %vm1262, %v1937, %v1847
      %v1975 = vsel %vm1262, %v1939, %v1849
      %v1977 = vsel %vm1262, %v1941, %v1851
      %v1979 = vsel %vm1262, %v1943, %v1853
      %v1981 = vsel %vm1262, %v1945, %v1855
      %v1983 = vsel %vm1262, %v1947, %v1857
      %v1985 = vsel %vm1262, %v1949, %v1859
      %v1987 = vsel %vm1262, %v1951, %v1861
      %v1989 = vsel %vm1262, %v1953, %v1863
      %v1991 = vsel %vm1262, %v1955, %v1865
      %v1993 = vsel %vm1262, %v1957, %v1867
      %v1995 = vsel %vm1262, %v1959, %v1869
      %v2014 = vunpack.c.l.b16 %v1961
      %v2015 = vunpack.c.h.b16 %v1961
      %v2016 = vunpack.c.l.b16 %v1963
      %v2017 = vunpack.c.h.b16 %v1963
      %v2018 = vunpack.c.l.b16 %v1965
      %v2019 = vunpack.c.h.b16 %v1965
      %v2020 = vunpack.c.l.b16 %v1967
      %v2021 = vunpack.c.h.b16 %v1967
      %v2022 = vunpack.c.l.b16 %v1969
      %v2023 = vunpack.c.h.b16 %v1969
      %v2024 = vunpack.c.l.b16 %v1971
      %v2025 = vunpack.c.h.b16 %v1971
      %v2026 = vunpack.c.l.b16 %v1973
      %v2027 = vunpack.c.h.b16 %v1973
      %v2028 = vunpack.c.l.b16 %v1975
      %v2029 = vunpack.c.h.b16 %v1975
      %v2030 = vunpack.c.l.b16 %v1977
      %v2031 = vunpack.c.h.b16 %v1977
      %v2032 = vunpack.c.l.b16 %v1979
      %v2033 = vunpack.c.h.b16 %v1979
      %v2034 = vunpack.c.l.b16 %v1981
      %v2035 = vunpack.c.h.b16 %v1981
      %v2036 = vunpack.c.l.b16 %v1983
      %v2037 = vunpack.c.h.b16 %v1983
      %v2038 = vunpack.c.l.b16 %v1985
      %v2039 = vunpack.c.h.b16 %v1985
      %v2040 = vunpack.c.l.b16 %v1987
      %v2041 = vunpack.c.h.b16 %v1987
      %v2042 = vunpack.c.l.b16 %v1989
      %v2043 = vunpack.c.h.b16 %v1989
      %v2044 = vunpack.c.l.b16 %v1991
      %v2045 = vunpack.c.h.b16 %v1991
      %v2046 = vunpack.c.l.b16 %v1993
      %v2047 = vunpack.c.h.b16 %v1993
      %v2048 = vunpack.c.l.b16 %v1995
      %v2049 = vunpack.c.h.b16 %v1995
      %v2050 = vpack.c.b16 %v2014, %v2014
      %v2051 = vpack.c.b16 %v2015, %v2015
      %v2052 = vpack.c.b16 %v2016, %v2016
      %v2053 = vpack.c.b16 %v2017, %v2017
      %v2054 = vpack.c.b16 %v2018, %v2018
      %v2055 = vpack.c.b16 %v2019, %v2019
      %v2056 = vpack.c.b16 %v2020, %v2020
      %v2057 = vpack.c.b16 %v2021, %v2021
      %v2058 = vpack.c.b16 %v2022, %v2022
      %v2059 = vpack.c.b16 %v2023, %v2023
      %v2060 = vpack.c.b16 %v2024, %v2024
      %v2061 = vpack.c.b16 %v2025, %v2025
      %v2062 = vpack.c.b16 %v2026, %v2026
      %v2063 = vpack.c.b16 %v2027, %v2027
      %v2064 = vpack.c.b16 %v2028, %v2028
      %v2065 = vpack.c.b16 %v2029, %v2029
      %v2066 = vpack.c.b16 %v2030, %v2030
      %v2067 = vpack.c.b16 %v2031, %v2031
      %v2068 = vpack.c.b16 %v2032, %v2032
      %v2069 = vpack.c.b16 %v2033, %v2033
      %v2070 = vpack.c.b16 %v2034, %v2034
      %v2071 = vpack.c.b16 %v2035, %v2035
      %v2072 = vpack.c.b16 %v2036, %v2036
      %v2073 = vpack.c.b16 %v2037, %v2037
      %v2074 = vpack.c.b16 %v2038, %v2038
      %v2075 = vpack.c.b16 %v2039, %v2039
      %v2076 = vpack.c.b16 %v2040, %v2040
      %v2077 = vpack.c.b16 %v2041, %v2041
      %v2078 = vpack.c.b16 %v2042, %v2042
      %v2079 = vpack.c.b16 %v2043, %v2043
      %v2080 = vpack.c.b16 %v2044, %v2044
      %v2081 = vpack.c.b16 %v2045, %v2045
      %v2082 = vpack.c.b16 %v2046, %v2046
      %v2083 = vpack.c.b16 %v2047, %v2047
      %v2084 = vpack.c.b16 %v2048, %v2048
      %v2085 = vpack.c.b16 %v2049, %v2049
      %vm2122 = vcmask 257024
      %2123 = vst.msk [vmem:[%s192] sm:$0xf] %vm2122, %v2050
      %2124 = vst.msk [vmem:[%s192 + $0x4] sm:$0xf] %vm2122, %v2051
      %2125 = vst.msk [vmem:[%s192 + $0x8] sm:$0xf] %vm2122, %v2052
      %2126 = vst.msk [vmem:[%s192 + $0xc] sm:$0xf] %vm2122, %v2053
      %2127 = vst.msk [vmem:[%s192 + $0x10] sm:$0xf] %vm2122, %v2054
      %2128 = vst.msk [vmem:[%s192 + $0x14] sm:$0xf] %vm2122, %v2055
      %2129 = vst.msk [vmem:[%s192 + $0x18] sm:$0xf] %vm2122, %v2056
      %2130 = vst.msk [vmem:[%s192 + $0x1c] sm:$0xf] %vm2122, %v2057
      %2131 = vst.msk [vmem:[%s192 + $0x20] sm:$0xf] %vm2122, %v2058
      %2132 = vst.msk [vmem:[%s192 + $0x24] sm:$0xf] %vm2122, %v2059
      %2133 = vst.msk [vmem:[%s192 + $0x28] sm:$0xf] %vm2122, %v2060
      %2134 = vst.msk [vmem:[%s192 + $0x2c] sm:$0xf] %vm2122, %v2061
      %2135 = vst.msk [vmem:[%s192 + $0x30] sm:$0xf] %vm2122, %v2062
      %2136 = vst.msk [vmem:[%s192 + $0x34] sm:$0xf] %vm2122, %v2063
      %2137 = vst.msk [vmem:[%s192 + $0x38] sm:$0xf] %vm2122, %v2064
      %2138 = vst.msk [vmem:[%s192 + $0x3c] sm:$0xf] %vm2122, %v2065
      %2139 = vst.msk [vmem:[%s192 + $0x40] sm:$0xf] %vm2122, %v2066
      %2140 = vst.msk [vmem:[%s192 + $0x44] sm:$0xf] %vm2122, %v2067
      %2141 = vst.msk [vmem:[%s192 + $0x48] sm:$0xf] %vm2122, %v2068
      %2142 = vst.msk [vmem:[%s192 + $0x4c] sm:$0xf] %vm2122, %v2069
      %2143 = vst.msk [vmem:[%s192 + $0x50] sm:$0xf] %vm2122, %v2070
      %2144 = vst.msk [vmem:[%s192 + $0x54] sm:$0xf] %vm2122, %v2071
      %2145 = vst.msk [vmem:[%s192 + $0x58] sm:$0xf] %vm2122, %v2072
      %2146 = vst.msk [vmem:[%s192 + $0x5c] sm:$0xf] %vm2122, %v2073
      %2147 = vst.msk [vmem:[%s192 + $0x60] sm:$0xf] %vm2122, %v2074
      %2148 = vst.msk [vmem:[%s192 + $0x64] sm:$0xf] %vm2122, %v2075
      %2149 = vst.msk [vmem:[%s192 + $0x68] sm:$0xf] %vm2122, %v2076
      %2150 = vst.msk [vmem:[%s192 + $0x6c] sm:$0xf] %vm2122, %v2077
      %2151 = vst.msk [vmem:[%s192 + $0x70] sm:$0xf] %vm2122, %v2078
      %2152 = vst.msk [vmem:[%s192 + $0x74] sm:$0xf] %vm2122, %v2079
      %2153 = vst.msk [vmem:[%s192 + $0x78] sm:$0xf] %vm2122, %v2080
      %2154 = vst.msk [vmem:[%s192 + $0x7c] sm:$0xf] %vm2122, %v2081
      %2155 = vst.msk [vmem:[%s192 + $0x80] sm:$0xf] %vm2122, %v2082
      %2156 = vst.msk [vmem:[%s192 + $0x84] sm:$0xf] %vm2122, %v2083
      %2157 = vst.msk [vmem:[%s192 + $0x88] sm:$0xf] %vm2122, %v2084
      %2158 = vst.msk [vmem:[%s192 + $0x8c] sm:$0xf] %vm2122, %v2085
      %s2159 = smul.u32 36, %s19
      %p2160 = scmp.lt.s32.totalorder %s18, 1
      %s2161 = scalar_select %p2160, %s18, 1
      %p2162 = scmp.lt.s32.totalorder %s2159, 35
      %s2163 = scalar_select %p2162, %s2159, 35
      %s2164 = smul.addr %s2161, 36
      %s2165 = sadd.s32 %s2163, %s2164
      %s2166 = smul.addr %s2165, 4
      %s2167 = scalar_lea.vmem %s3, %s2166
      // Predicated region
      $region33: #{tpu_custom_call.1} parent=31 // pred_check
        %p2168 = pneg %p114
      $region34: #{tpu_custom_call.1} parent=31 // pred_check_branch
        %2170 = sbr.rel (%p2168) target = $region36
      $region35: #{tpu_custom_call.1} parent=31 // pred_region
        %s2171 = smul.u32 36, %s19
      $region36: #{tpu_custom_call.1} parent=31 // pred_fallthru
        _
    $region32: #{tpu_custom_call.1} parent=5 // pred_fallthru
      _
    %p2172 = scmp.le.s32.totalorder 2, %s9
    // Predicated region
    $region37: #{tpu_custom_call.1} parent=5 // pred_check
      %p2173 = pneg %p2172
    $region38: #{tpu_custom_call.1} parent=5 // pred_check_branch
      %2175 = sbr.rel (%p2173) target = $region40
    $region39: #{tpu_custom_call.1} parent=5 // pred_region
      %s2176 = ssub.s32 %s9, 2
      // Predicated region
      $region41: #{tpu_custom_call.1} parent=39 // pred_check
        %p2177 = pneg %p120
      $region42: #{tpu_custom_call.1} parent=39 // pred_check_branch
        %2179 = sbr.rel (%p2177) target = $region44
      $region43: #{tpu_custom_call.1} parent=39 // pred_region
        %s2180 = smul.u32 36, %s21
        %p2181 = scmp.lt.s32.totalorder %s20, 1
        %s2182 = scalar_select %p2181, %s20, 1
        %p2183 = scmp.lt.s32.totalorder %s2180, 35
        %s2184 = scalar_select %p2183, %s2180, 35
        %s2185 = smul.addr %s2182, 36
        %s2186 = sadd.s32 %s2184, %s2185
        %s2187 = smul.addr %s2186, 4
        %s2188 = scalar_lea.vmem %s3, %s2187
      $region44: #{tpu_custom_call.1} parent=39 // pred_fallthru
        _
    $region40: #{tpu_custom_call.1} parent=5 // pred_fallthru
      _
  $region6: #{tpu_custom_call.1} parent=0 // loop_footer
    %s13 = sadd.s32 1, %s9
  $region7: #{tpu_custom_call.1} parent=0 // loop_footer_branch
    %8 = sbr.rel target = $region3
  $region8: #{tpu_custom_call.1} parent=0 // loop_exit
    _

</llo_original>
